<compile_context>
chip_gen: v7x
topology: tpu7x:2x2x1
jax: 0.10.0
libtpu: 0.0.40
codegen_flags: <defaults>
</compile_context>

<pallas_src>
import functools

import jax
import jax.numpy as jnp
from jax.experimental import pallas as pl
from jax.experimental.pallas import tpu as pltpu

LOG_SIG_MAX = 2.0
LOG_SIG_MIN = -20.0
BN_EPS = 1e-5

# Safe on every generation (v7x physical VMEM is 64 MiB); the blocks used
# below are a few hundred KiB at most, independent of image size.
VMEM_LIMIT_BYTES = 32 * 1024 * 1024
CONV_ROW_TILE = 256   # rows of the (batch*OH*OW, K) im2col matrix per step
MLP_ROW_TILE = 128    # batch rows per step in the fused MLP tail (v7x: >=2 steps sooner)


# ---------------------------------------------------------------------------
# Fused matmul + folded-BN bias + ReLU kernel (used for the conv layers)
# ---------------------------------------------------------------------------
def _matmul_bias_relu_kernel(x_ref, w_ref, b_ref, o_ref):
    acc = jnp.dot(x_ref[...], w_ref[...], preferred_element_type=jnp.float32)
    # f32 epilogue (bias + relu), bf16 store of the inter-layer activation.
    o_ref[...] = jnp.maximum(acc + b_ref[...], 0.0).astype(o_ref.dtype)


def matmul_bias_relu(x, w, b, *, row_tile=CONV_ROW_TILE, out_dtype=jnp.bfloat16):
    """y = relu(x @ w + b).  x:(M,K) bf16, w:(K,N) bf16 resident, b:(1,N) f32."""
    m, k = x.shape
    n_out = w.shape[1]
    tm = m if m <= row_tile else row_tile
    grid_m = pl.cdiv(m, tm)          # ragged last block handled by Pallas masking
    return pl.pallas_call(
        _matmul_bias_relu_kernel,
        out_shape=jax.ShapeDtypeStruct((m, n_out), out_dtype),
        grid=(grid_m,),
        in_specs=[
            pl.BlockSpec((tm, k), lambda i: (i, 0)),
            pl.BlockSpec((k, n_out), lambda i: (0, 0)),   # resident weight
            pl.BlockSpec((1, n_out), lambda i: (0, 0)),   # resident bias
        ],
        out_specs=pl.BlockSpec((tm, n_out), lambda i: (i, 0)),
        compiler_params=pltpu.CompilerParams(
            dimension_semantics=("parallel",),
            vmem_limit_bytes=VMEM_LIMIT_BYTES),
        cost_estimate=pl.CostEstimate(
            flops=2 * m * k * n_out,
            transcendentals=0,
            bytes_accessed=2 * (m * k + k * n_out + m * n_out) + 4 * n_out),
    )(x, w, b)


# ---------------------------------------------------------------------------
# Fused MLP tail: [optional conv3] -> linear1 -> linear2 -> [mean | log_std]
# ---------------------------------------------------------------------------
def _fused_mlp_kernel(*refs, n_layers, a_dim):
    x_ref, o_ref = refs[0], refs[-1]
    h = x_ref[...]                                    # bf16 activations
    for li in range(n_layers):
        w_ref = refs[1 + 2 * li]
        b_ref = refs[2 + 2 * li]
        acc = jnp.dot(h, w_ref[...], preferred_element_type=jnp.float32) + b_ref[...]
        if li + 1 < n_layers:
            # f32 bias+relu epilogue, cast back to bf16 only for the next dot.
            h = jnp.maximum(acc, 0.0).astype(jnp.bfloat16)
        else:
            # cols [0,a) = mean, [a,2a) = log_std (clamped), rest zero padding.
            col = jax.lax.broadcasted_iota(jnp.int32, acc.shape, 1)
            is_logstd = jnp.logical_and(col >= a_dim, col < 2 * a_dim)
            y = jnp.where(is_logstd, jnp.clip(acc, LOG_SIG_MIN, LOG_SIG_MAX), acc)
            o_ref[...] = y.astype(o_ref.dtype)


def fused_mlp_head(x, layers, *, num_actions, row_tile=MLP_ROW_TILE):
    """x:(batch,K0) bf16; layers: list of (w bf16 (Kin,Kout), b f32 (1,Kout)).
    ReLU after every layer except the last; the last layer is the lane-padded
    [mean | log_std] head with the clamp applied in-kernel."""
    m, k0 = x.shape
    npad = layers[-1][0].shape[1]
    tm = m if m <= row_tile else row_tile
    grid_m = pl.cdiv(m, tm)

    in_specs = [pl.BlockSpec((tm, k0), lambda i: (i, 0))]
    args = [x]
    flops = 0
    bytes_accessed = 2 * m * k0 + 4 * m * npad
    for w, b in layers:
        kin, kout = w.shape
        in_specs.append(pl.BlockSpec((kin, kout), lambda i: (0, 0)))   # resident
        in_specs.append(pl.BlockSpec((1, kout), lambda i: (0, 0)))     # resident
        args.extend([w, b])
        flops += 2 * m * kin * kout
        bytes_accessed += 2 * kin * kout + 4 * kout
    # TODO(synk): for very large linear1 (tens of MiB on v7x) keep resident
    # weights single-buffered (pipeline_mode=pl.Buffered(1)) or tile K with a
    # reduction grid axis; at these sizes the weights are a few KiB so it's moot.

    out = pl.pallas_call(
        functools.partial(_fused_mlp_kernel, n_layers=len(layers), a_dim=num_actions),
        out_shape=jax.ShapeDtypeStruct((m, npad), jnp.float32),
        grid=(grid_m,),
        in_specs=in_specs,
        out_specs=pl.BlockSpec((tm, npad), lambda i: (i, 0)),
        compiler_params=pltpu.CompilerParams(
            dimension_semantics=("parallel",),
            vmem_limit_bytes=VMEM_LIMIT_BYTES),
        cost_estimate=pl.CostEstimate(
            flops=flops, transcendentals=0, bytes_accessed=bytes_accessed),
    )(*args)
    return out[:, :num_actions], out[:, num_actions:2 * num_actions]


# ---------------------------------------------------------------------------
# im2col patch extraction (XLA side), (dy, dx, c) ordering
# ---------------------------------------------------------------------------
def _extract_patches_nhwc(x, k=3, s=2):
    n, h, w, c = x.shape
    oh = (h - k) // s + 1
    ow = (w - k) // s + 1
    taps = []
    for dy in range(k):
        for dx in range(k):
            taps.append(x[:, dy:dy + s * (oh - 1) + 1:s,
                          dx:dx + s * (ow - 1) + 1:s, :])
    return jnp.concatenate(taps, axis=-1), oh, ow


def conv_bn_relu(x_nhwc, w_folded, b_folded):
    """Conv2d(3, stride=2, valid) + eval-mode BN + ReLU as one Pallas matmul."""
    n = x_nhwc.shape[0]
    patches, oh, ow = _extract_patches_nhwc(x_nhwc)
    xm = patches.reshape(n * oh * ow, patches.shape[-1])
    y = matmul_bias_relu(xm, w_folded, b_folded)
    return y.reshape(n, oh, ow, w_folded.shape[1])


# ---------------------------------------------------------------------------
# Parameter initialization (xavier_uniform / zero bias like PyTorch) + folding
# ---------------------------------------------------------------------------
def xavier_uniform(key, shape, fan_in, fan_out):
    a = jnp.sqrt(6.0 / (fan_in + fan_out))
    return jax.random.uniform(key, shape, jnp.float32, minval=-a, maxval=a)


def init_params(key, h, w, num_inputs, num_actions, hidden_dim):
    def conv_size_out(size, k=3, s=2):
        return (size - (k - 1) - 1) // s + 1

    convw = conv_size_out(conv_size_out(conv_size_out(w)))
    convh = conv_size_out(conv_size_out(conv_size_out(h)))
    linear_input_size = convw * convh * 64

    keys = jax.random.split(key, 10)
    p = {}
    p["conv1_w"] = xavier_uniform(keys[0], (64, num_inputs, 3, 3),
                                  num_inputs * 9, 64 * 9)
    p["conv2_w"] = xavier_uniform(keys[1], (64, 64, 3, 3), 64 * 9, 64 * 9)
    p["conv3_w"] = xavier_uniform(keys[2], (64, 64, 3, 3), 64 * 9, 64 * 9)
    for i, kk in zip((1, 2, 3), (keys[7], keys[8], keys[9])):
        k1, k2, k3, k4 = jax.random.split(kk, 4)
        p[f"conv{i}_b"] = jnp.zeros((64,), jnp.float32)
        # Non-trivial eval-mode BatchNorm statistics so the folding is exercised.
        p[f"bn{i}_gamma"] = 1.0 + 0.1 * jax.random.normal(k1, (64,), jnp.float32)
        p[f"bn{i}_beta"] = 0.05 * jax.random.normal(k2, (64,), jnp.float32)
        p[f"bn{i}_mean"] = 0.05 * jax.random.normal(k3, (64,), jnp.float32)
        p[f"bn{i}_var"] = 1.0 + 0.2 * jax.random.uniform(k4, (64,), jnp.float32)

    # Linear weights stored (in, out) so the math is x @ W; linear1 rows are in
    # PyTorch NCHW-flatten (c, h, w) order, as a loaded checkpoint would be.
    p["lin1_w"] = xavier_uniform(keys[3], (linear_input_size, hidden_dim),
                                 linear_input_size, hidden_dim)
    p["lin1_b"] = jnp.zeros((hidden_dim,), jnp.float32)
    p["lin2_w"] = xavier_uniform(keys[4], (hidden_dim, hidden_dim),
                                 hidden_dim, hidden_dim)
    p["lin2_b"] = jnp.zeros((hidden_dim,), jnp.float32)
    p["mean_w"] = xavier_uniform(keys[5], (hidden_dim, num_actions),
                                 hidden_dim, num_actions)
    p["mean_b"] = jnp.zeros((num_actions,), jnp.float32)
    p["logstd_w"] = xavier_uniform(keys[6], (hidden_dim, num_actions),
                                   hidden_dim, num_actions)
    p["logstd_b"] = jnp.zeros((num_actions,), jnp.float32)
    return p, (convh, convw)


def fold_params(params, convh, convw):
    """One-time (off the hot path) folding:
       * eval BatchNorm folded into conv weights / bias,
       * conv weights reshaped to im2col (9*Cin, Cout) in (dy, dx, cin) order,
       * conv3 fused into the MLP tail when its spatial output is 1x1
         (otherwise linear1 rows are permuted NCHW->NHWC flatten order),
       * heads concatenated [mean | log_std] and zero-padded to 128 lanes,
       * all MXU weight operands cast to bf16, biases kept in f32."""
    fuse_conv3 = (convh == 1 and convw == 1)
    f = {}

    def fold_conv(i):
        w = params[f"conv{i}_w"]                          # (Cout, Cin, 3, 3)
        cout, cin, kh, kw = w.shape
        scale = params[f"bn{i}_gamma"] / jnp.sqrt(params[f"bn{i}_var"] + BN_EPS)
        wk = jnp.transpose(w, (2, 3, 1, 0)).reshape(kh * kw * cin, cout)
        wk = (wk * scale[None, :]).astype(jnp.bfloat16)
        bk = ((params[f"conv{i}_b"] - params[f"bn{i}_mean"]) * scale
              + params[f"bn{i}_beta"]).reshape(1, cout).astype(jnp.float32)
        return wk, bk

    f["conv1_w"], f["conv1_b"] = fold_conv(1)
    f["conv2_w"], f["conv2_b"] = fold_conv(2)
    wc3, bc3 = fold_conv(3)

    hid = params["lin1_w"].shape[1]
    w1 = params["lin1_w"]
    if not fuse_conv3:
        f["conv3_w"], f["conv3_b"] = wc3, bc3
        # permute linear1 rows from NCHW flatten (c,h,w) to NHWC flatten (h,w,c)
        w1 = jnp.transpose(w1.reshape(64, convh * convw, hid),
                           (1, 0, 2)).reshape(convh * convw * 64, hid)

    a = params["mean_w"].shape[1]
    npad = max(128, ((2 * a + 127) // 128) * 128)
    wh = jnp.concatenate([params["mean_w"], params["logstd_w"]], axis=1)
    bh = jnp.concatenate([params["mean_b"], params["logstd_b"]], axis=0)
    wh = jnp.pad(wh, ((0, 0), (0, npad - 2 * a))).astype(jnp.bfloat16)
    bh = jnp.pad(bh, (0, npad - 2 * a)).reshape(1, npad).astype(jnp.float32)

    layers = []
    if fuse_conv3:
        layers.append((wc3, bc3))                # conv3 becomes the first MLP layer
    layers.append((w1.astype(jnp.bfloat16),
                   params["lin1_b"].reshape(1, hid).astype(jnp.float32)))
    layers.append((params["lin2_w"].astype(jnp.bfloat16),
                   params["lin2_b"].reshape(1, hid).astype(jnp.float32)))
    layers.append((wh, bh))
    f["mlp_layers"] = layers
    return f, fuse_conv3


# ---------------------------------------------------------------------------
# Forward pass (matches Conv_GaussianPolicy.forward, eval-mode BatchNorm)
# ---------------------------------------------------------------------------
@functools.partial(jax.jit, static_argnames=("num_actions", "fuse_conv3"))
def conv_gaussian_policy_forward(fparams, state_nchw, *, num_actions, fuse_conv3):
    # NCHW -> NHWC once, already in bf16 (MXU operand dtype).  After this, the
    # only remaining XLA-side re-layout is the conv1->conv2 patch extraction.
    # TODO(synk): that extraction could move in-kernel with strided pl.ds
    #             loads; it is kept in XLA here for conservative lowering.
    x = jnp.transpose(state_nchw, (0, 2, 3, 1)).astype(jnp.bfloat16)
    x = conv_bn_relu(x, fparams["conv1_w"], fparams["conv1_b"])
    x = conv_bn_relu(x, fparams["conv2_w"], fparams["conv2_b"])
    n = x.shape[0]
    if fuse_conv3:
        # conv3 output is 1x1 spatial: its im2col is exactly the NHWC flatten
        # of conv2's output (a free contiguous reshape), and conv3 itself is
        # the first layer of the fused MLP-tail kernel.
        xf = x.reshape(n, -1)
    else:
        x = conv_bn_relu(x, fparams["conv3_w"], fparams["conv3_b"])
        xf = x.reshape(n, -1)   # NHWC flatten; linear1 rows permuted at fold time
    return fused_mlp_head(xf, fparams["mlp_layers"], num_actions=num_actions)


# ---------------------------------------------------------------------------
# Pure-JAX f32 reference (mirrors the PyTorch module) for validation
# ---------------------------------------------------------------------------
def _reference_forward(params, state_nchw):
    hp = jax.lax.Precision.HIGHEST
    x = state_nchw.astype(jnp.float32)
    for i in (1, 2, 3):
        x = jax.lax.conv_general_dilated(
            x, params[f"conv{i}_w"], window_strides=(2, 2), padding="VALID",
            dimension_numbers=("NCHW", "OIHW", "NCHW"), precision=hp)
        x = x + params[f"conv{i}_b"][None, :, None, None]
        scale = params[f"bn{i}_gamma"] / jnp.sqrt(params[f"bn{i}_var"] + BN_EPS)
        x = ((x - params[f"bn{i}_mean"][None, :, None, None])
             * scale[None, :, None, None]
             + params[f"bn{i}_beta"][None, :, None, None])
        x = jnp.maximum(x, 0.0)
    x = x.reshape(x.shape[0], -1)                     # NCHW flatten, as PyTorch
    x = jnp.maximum(jnp.dot(x, params["lin1_w"], precision=hp) + params["lin1_b"], 0.0)
    x = jnp.maximum(jnp.dot(x, params["lin2_w"], precision=hp) + params["lin2_b"], 0.0)
    mean = jnp.dot(x, params["mean_w"], precision=hp) + params["mean_b"]
    log_std = jnp.clip(
        jnp.dot(x, params["logstd_w"], precision=hp) + params["logstd_b"],
        LOG_SIG_MIN, LOG_SIG_MAX)
    return mean, log_std


if __name__ == "__main__":
    # Small shapes consistent with the module: batch=2, num_inputs=4, 16x16
    # spatial (-> conv stack output 1x1x64), hidden_dim=32, num_actions=6.
    batch, num_inputs, H, W = 2, 4, 16, 16
    hidden_dim, num_actions = 32, 6

    key = jax.random.PRNGKey(0)
    k_param, k_input = jax.random.split(key)
    params, (convh, convw) = init_params(k_param, H, W, num_inputs,
                                         num_actions, hidden_dim)
    fparams, fuse_conv3 = fold_params(params, convh, convw)

    state = jax.random.normal(k_input, (batch, num_inputs, H, W), jnp.float32)

    mean, log_std = conv_gaussian_policy_forward(
        fparams, state, num_actions=num_actions, fuse_conv3=fuse_conv3)
    jax.block_until_ready((mean, log_std))

    assert mean.shape == (batch, num_actions)
    assert log_std.shape == (batch, num_actions)
    assert bool(jnp.all(log_std >= LOG_SIG_MIN)) and bool(jnp.all(log_std <= LOG_SIG_MAX))

    # Structural correctness vs a plain-XLA f32 reference.  Tolerance accounts
    # for bf16 MXU operands (weights + inter-layer activations); structural
    # bugs (ordering / folding errors) produce O(1) differences.
    mean_ref, log_std_ref = _reference_forward(params, state)
    assert bool(jnp.allclose(mean, mean_ref, atol=2e-2, rtol=2e-2)), \
        float(jnp.max(jnp.abs(mean - mean_ref)))
    assert bool(jnp.allclose(log_std, log_std_ref, atol=2e-2, rtol=2e-2)), \
        float(jnp.max(jnp.abs(log_std - log_std_ref)))

    print("KERNEL_OK")
</pallas_src>

<mosaic_0001>
module attributes {stable_mosaic.version = 11 : i64} {
  func.func @_matmul_bias_relu_kernel(%arg0: i32, %arg1: memref<98x36xbf16, #tpu.memory_space<vmem>>, %arg2: memref<36x64xbf16, #tpu.memory_space<vmem>>, %arg3: memref<1x64xf32, #tpu.memory_space<vmem>>, %arg4: memref<98x64xbf16, #tpu.memory_space<vmem>>) attributes {dimension_semantics = [#tpu.dimension_semantics<parallel>], iteration_bounds = array<i64: 1>, scalar_prefetch = 0 : i64, scratch_operands = 0 : i64, tpu.core_type = #tpu.core_type<tc>, window_params = [{transform_indices = @transform_0, window_bounds = array<i64: 98, 36>}, {pipeline_mode = #tpu.pipeline_mode<synchronous>, transform_indices = @transform_1, window_bounds = array<i64: 36, 64>}, {pipeline_mode = #tpu.pipeline_mode<synchronous>, transform_indices = @transform_2, window_bounds = array<i64: 1, 64>}, {transform_indices = @transform_3, window_bounds = array<i64: 98, 64>}]} {
    %c0 = arith.constant 0 : index
    %c0_0 = arith.constant 0 : index
    %0 = vector.load %arg1[%c0, %c0_0] : memref<98x36xbf16, #tpu.memory_space<vmem>>, vector<98x36xbf16>
    %c0_1 = arith.constant 0 : index
    %c0_2 = arith.constant 0 : index
    %1 = vector.load %arg2[%c0_1, %c0_2] : memref<36x64xbf16, #tpu.memory_space<vmem>>, vector<36x64xbf16>
    %cst = arith.constant dense<0.000000e+00> : vector<98x64xf32>
    %2 = tpu.matmul %0, %1, %cst {dimension_numbers = #tpu.dot_dimension_numbers<[1], [0], [0], [1], [0, 0, 1, 1], [], []>} : vector<98x36xbf16>, vector<36x64xbf16>, vector<98x64xf32> -> vector<98x64xf32>
    %c0_3 = arith.constant 0 : index
    %c0_4 = arith.constant 0 : index
    %3 = vector.load %arg3[%c0_3, %c0_4] : memref<1x64xf32, #tpu.memory_space<vmem>>, vector<1x64xf32>
    %4 = vector.broadcast %3 : vector<1x64xf32> to vector<98x64xf32>
    %5 = arith.addf %2, %4 : vector<98x64xf32>
    %cst_5 = arith.constant 0.000000e+00 : f32
    %6 = vector.broadcast %cst_5 : f32 to vector<98x64xf32>
    %7 = arith.maximumf %5, %6 : vector<98x64xf32>
    %8 = arith.truncf %7 : vector<98x64xf32> to vector<98x64xbf16>
    %c0_6 = arith.constant 0 : index
    %c0_7 = arith.constant 0 : index
    %9 = vector.load %arg4[%c0_6, %c0_7] : memref<98x64xbf16, #tpu.memory_space<vmem>>, vector<98x64xbf16>
    tpu.vector_store %arg4[%c0_6, %c0_7], %8 {strides = array<i32>} : memref<98x64xbf16, #tpu.memory_space<vmem>>, vector<98x64xbf16>,
    return
  }
  func.func @transform_0(%arg0: i32) -> (i32, i32) {
    %c0_i32 = arith.constant 0 : i32
    %c0_i32_0 = arith.constant 0 : i32
    return %arg0, %c0_i32 : i32, i32
  }
  func.func @transform_1(%arg0: i32) -> (i32, i32) {
    %c0_i32 = arith.constant 0 : i32
    %c0_i32_0 = arith.constant 0 : i32
    %c0_i32_1 = arith.constant 0 : i32
    return %c0_i32, %c0_i32_0 : i32, i32
  }
  func.func @transform_2(%arg0: i32) -> (i32, i32) {
    %c0_i32 = arith.constant 0 : i32
    %c0_i32_0 = arith.constant 0 : i32
    %c0_i32_1 = arith.constant 0 : i32
    return %c0_i32, %c0_i32_0 : i32, i32
  }
  func.func @transform_3(%arg0: i32) -> (i32, i32) {
    %c0_i32 = arith.constant 0 : i32
    %c0_i32_0 = arith.constant 0 : i32
    return %arg0, %c0_i32 : i32, i32
  }
}

module attributes {stable_mosaic.version = 11 : i64} {
  func.func @_matmul_bias_relu_kernel(%arg0: i32, %arg1: memref<18x576xbf16, #tpu.memory_space<vmem>>, %arg2: memref<576x64xbf16, #tpu.memory_space<vmem>>, %arg3: memref<1x64xf32, #tpu.memory_space<vmem>>, %arg4: memref<18x64xbf16, #tpu.memory_space<vmem>>) attributes {dimension_semantics = [#tpu.dimension_semantics<parallel>], iteration_bounds = array<i64: 1>, scalar_prefetch = 0 : i64, scratch_operands = 0 : i64, tpu.core_type = #tpu.core_type<tc>, window_params = [{transform_indices = @transform_0, window_bounds = array<i64: 18, 576>}, {pipeline_mode = #tpu.pipeline_mode<synchronous>, transform_indices = @transform_1, window_bounds = array<i64: 576, 64>}, {pipeline_mode = #tpu.pipeline_mode<synchronous>, transform_indices = @transform_2, window_bounds = array<i64: 1, 64>}, {transform_indices = @transform_3, window_bounds = array<i64: 18, 64>}]} {
    %c0 = arith.constant 0 : index
    %c0_0 = arith.constant 0 : index
    %0 = vector.load %arg1[%c0, %c0_0] : memref<18x576xbf16, #tpu.memory_space<vmem>>, vector<18x576xbf16>
    %c0_1 = arith.constant 0 : index
    %c0_2 = arith.constant 0 : index
    %1 = vector.load %arg2[%c0_1, %c0_2] : memref<576x64xbf16, #tpu.memory_space<vmem>>, vector<576x64xbf16>
    %cst = arith.constant dense<0.000000e+00> : vector<18x64xf32>
    %2 = tpu.matmul %0, %1, %cst {dimension_numbers = #tpu.dot_dimension_numbers<[1], [0], [0], [1], [0, 0, 1, 1], [], []>} : vector<18x576xbf16>, vector<576x64xbf16>, vector<18x64xf32> -> vector<18x64xf32>
    %c0_3 = arith.constant 0 : index
    %c0_4 = arith.constant 0 : index
    %3 = vector.load %arg3[%c0_3, %c0_4] : memref<1x64xf32, #tpu.memory_space<vmem>>, vector<1x64xf32>
    %4 = vector.broadcast %3 : vector<1x64xf32> to vector<18x64xf32>
    %5 = arith.addf %2, %4 : vector<18x64xf32>
    %cst_5 = arith.constant 0.000000e+00 : f32
    %6 = vector.broadcast %cst_5 : f32 to vector<18x64xf32>
    %7 = arith.maximumf %5, %6 : vector<18x64xf32>
    %8 = arith.truncf %7 : vector<18x64xf32> to vector<18x64xbf16>
    %c0_6 = arith.constant 0 : index
    %c0_7 = arith.constant 0 : index
    %9 = vector.load %arg4[%c0_6, %c0_7] : memref<18x64xbf16, #tpu.memory_space<vmem>>, vector<18x64xbf16>
    tpu.vector_store %arg4[%c0_6, %c0_7], %8 {strides = array<i32>} : memref<18x64xbf16, #tpu.memory_space<vmem>>, vector<18x64xbf16>,
    return
  }
  func.func @transform_0(%arg0: i32) -> (i32, i32) {
    %c0_i32 = arith.constant 0 : i32
    %c0_i32_0 = arith.constant 0 : i32
    return %arg0, %c0_i32 : i32, i32
  }
  func.func @transform_1(%arg0: i32) -> (i32, i32) {
    %c0_i32 = arith.constant 0 : i32
    %c0_i32_0 = arith.constant 0 : i32
    %c0_i32_1 = arith.constant 0 : i32
    return %c0_i32, %c0_i32_0 : i32, i32
  }
  func.func @transform_2(%arg0: i32) -> (i32, i32) {
    %c0_i32 = arith.constant 0 : i32
    %c0_i32_0 = arith.constant 0 : i32
    %c0_i32_1 = arith.constant 0 : i32
    return %c0_i32, %c0_i32_0 : i32, i32
  }
  func.func @transform_3(%arg0: i32) -> (i32, i32) {
    %c0_i32 = arith.constant 0 : i32
    %c0_i32_0 = arith.constant 0 : i32
    return %arg0, %c0_i32 : i32, i32
  }
}

module attributes {stable_mosaic.version = 11 : i64} {
  func.func @_fused_mlp_kernel(%arg0: i32, %arg1: memref<2x576xbf16, #tpu.memory_space<vmem>>, %arg2: memref<576x64xbf16, #tpu.memory_space<vmem>>, %arg3: memref<1x64xf32, #tpu.memory_space<vmem>>, %arg4: memref<64x32xbf16, #tpu.memory_space<vmem>>, %arg5: memref<1x32xf32, #tpu.memory_space<vmem>>, %arg6: memref<32x32xbf16, #tpu.memory_space<vmem>>, %arg7: memref<1x32xf32, #tpu.memory_space<vmem>>, %arg8: memref<32x128xbf16, #tpu.memory_space<vmem>>, %arg9: memref<1x128xf32, #tpu.memory_space<vmem>>, %arg10: memref<2x128xf32, #tpu.memory_space<vmem>>) attributes {dimension_semantics = [#tpu.dimension_semantics<parallel>], iteration_bounds = array<i64: 1>, scalar_prefetch = 0 : i64, scratch_operands = 0 : i64, tpu.core_type = #tpu.core_type<tc>, window_params = [{transform_indices = @transform_0, window_bounds = array<i64: 2, 576>}, {pipeline_mode = #tpu.pipeline_mode<synchronous>, transform_indices = @transform_1, window_bounds = array<i64: 576, 64>}, {pipeline_mode = #tpu.pipeline_mode<synchronous>, transform_indices = @transform_2, window_bounds = array<i64: 1, 64>}, {pipeline_mode = #tpu.pipeline_mode<synchronous>, transform_indices = @transform_3, window_bounds = array<i64: 64, 32>}, {pipeline_mode = #tpu.pipeline_mode<synchronous>, transform_indices = @transform_4, window_bounds = array<i64: 1, 32>}, {pipeline_mode = #tpu.pipeline_mode<synchronous>, transform_indices = @transform_5, window_bounds = array<i64: 32, 32>}, {pipeline_mode = #tpu.pipeline_mode<synchronous>, transform_indices = @transform_6, window_bounds = array<i64: 1, 32>}, {pipeline_mode = #tpu.pipeline_mode<synchronous>, transform_indices = @transform_7, window_bounds = array<i64: 32, 128>}, {pipeline_mode = #tpu.pipeline_mode<synchronous>, transform_indices = @transform_8, window_bounds = array<i64: 1, 128>}, {transform_indices = @transform_9, window_bounds = array<i64: 2, 128>}]} {
    %c0 = arith.constant 0 : index
    %c0_0 = arith.constant 0 : index
    %0 = vector.load %arg1[%c0, %c0_0] : memref<2x576xbf16, #tpu.memory_space<vmem>>, vector<2x576xbf16>
    %c0_1 = arith.constant 0 : index
    %c0_2 = arith.constant 0 : index
    %1 = vector.load %arg2[%c0_1, %c0_2] : memref<576x64xbf16, #tpu.memory_space<vmem>>, vector<576x64xbf16>
    %cst = arith.constant dense<0.000000e+00> : vector<2x64xf32>
    %2 = tpu.matmul %0, %1, %cst {dimension_numbers = #tpu.dot_dimension_numbers<[1], [0], [0], [1], [0, 0, 1, 1], [], []>} : vector<2x576xbf16>, vector<576x64xbf16>, vector<2x64xf32> -> vector<2x64xf32>
    %c0_3 = arith.constant 0 : index
    %c0_4 = arith.constant 0 : index
    %3 = vector.load %arg3[%c0_3, %c0_4] : memref<1x64xf32, #tpu.memory_space<vmem>>, vector<1x64xf32>
    %4 = vector.broadcast %3 : vector<1x64xf32> to vector<2x64xf32>
    %5 = arith.addf %2, %4 : vector<2x64xf32>
    %cst_5 = arith.constant 0.000000e+00 : f32
    %6 = vector.broadcast %cst_5 : f32 to vector<2x64xf32>
    %7 = arith.maximumf %5, %6 : vector<2x64xf32>
    %8 = arith.truncf %7 : vector<2x64xf32> to vector<2x64xbf16>
    %c0_6 = arith.constant 0 : index
    %c0_7 = arith.constant 0 : index
    %9 = vector.load %arg4[%c0_6, %c0_7] : memref<64x32xbf16, #tpu.memory_space<vmem>>, vector<64x32xbf16>
    %cst_8 = arith.constant dense<0.000000e+00> : vector<2x32xf32>
    %10 = tpu.matmul %8, %9, %cst_8 {dimension_numbers = #tpu.dot_dimension_numbers<[1], [0], [0], [1], [0, 0, 1, 1], [], []>} : vector<2x64xbf16>, vector<64x32xbf16>, vector<2x32xf32> -> vector<2x32xf32>
    %c0_9 = arith.constant 0 : index
    %c0_10 = arith.constant 0 : index
    %11 = vector.load %arg5[%c0_9, %c0_10] : memref<1x32xf32, #tpu.memory_space<vmem>>, vector<1x32xf32>
    %12 = vector.broadcast %11 : vector<1x32xf32> to vector<2x32xf32>
    %13 = arith.addf %10, %12 : vector<2x32xf32>
    %cst_11 = arith.constant 0.000000e+00 : f32
    %14 = vector.broadcast %cst_11 : f32 to vector<2x32xf32>
    %15 = arith.maximumf %13, %14 : vector<2x32xf32>
    %16 = arith.truncf %15 : vector<2x32xf32> to vector<2x32xbf16>
    %c0_12 = arith.constant 0 : index
    %c0_13 = arith.constant 0 : index
    %17 = vector.load %arg6[%c0_12, %c0_13] : memref<32x32xbf16, #tpu.memory_space<vmem>>, vector<32x32xbf16>
    %cst_14 = arith.constant dense<0.000000e+00> : vector<2x32xf32>
    %18 = tpu.matmul %16, %17, %cst_14 {dimension_numbers = #tpu.dot_dimension_numbers<[1], [0], [0], [1], [0, 0, 1, 1], [], []>} : vector<2x32xbf16>, vector<32x32xbf16>, vector<2x32xf32> -> vector<2x32xf32>
    %c0_15 = arith.constant 0 : index
    %c0_16 = arith.constant 0 : index
    %19 = vector.load %arg7[%c0_15, %c0_16] : memref<1x32xf32, #tpu.memory_space<vmem>>, vector<1x32xf32>
    %20 = vector.broadcast %19 : vector<1x32xf32> to vector<2x32xf32>
    %21 = arith.addf %18, %20 : vector<2x32xf32>
    %cst_17 = arith.constant 0.000000e+00 : f32
    %22 = vector.broadcast %cst_17 : f32 to vector<2x32xf32>
    %23 = arith.maximumf %21, %22 : vector<2x32xf32>
    %24 = arith.truncf %23 : vector<2x32xf32> to vector<2x32xbf16>
    %c0_18 = arith.constant 0 : index
    %c0_19 = arith.constant 0 : index
    %25 = vector.load %arg8[%c0_18, %c0_19] : memref<32x128xbf16, #tpu.memory_space<vmem>>, vector<32x128xbf16>
    %cst_20 = arith.constant dense<0.000000e+00> : vector<2x128xf32>
    %26 = tpu.matmul %24, %25, %cst_20 {dimension_numbers = #tpu.dot_dimension_numbers<[1], [0], [0], [1], [0, 0, 1, 1], [], []>} : vector<2x32xbf16>, vector<32x128xbf16>, vector<2x128xf32> -> vector<2x128xf32>
    %c0_21 = arith.constant 0 : index
    %c0_22 = arith.constant 0 : index
    %27 = vector.load %arg9[%c0_21, %c0_22] : memref<1x128xf32, #tpu.memory_space<vmem>>, vector<1x128xf32>
    %28 = vector.broadcast %27 : vector<1x128xf32> to vector<2x128xf32>
    %29 = arith.addf %26, %28 : vector<2x128xf32>
    %30 = tpu.iota {dimensions = array<i32: 1>} : vector<2x128xi32>
    %c6_i32 = arith.constant 6 : i32
    %31 = vector.broadcast %c6_i32 : i32 to vector<2x128xi32>
    %32 = arith.cmpi sge, %30, %31 : vector<2x128xi32>
    %c12_i32 = arith.constant 12 : i32
    %33 = vector.broadcast %c12_i32 : i32 to vector<2x128xi32>
    %34 = arith.cmpi slt, %30, %33 : vector<2x128xi32>
    %35 = arith.andi %32, %34 : vector<2x128xi1>
    %cst_23 = arith.constant -2.000000e+01 : f32
    %cst_24 = arith.constant 2.000000e+00 : f32
    %36 = vector.broadcast %cst_23 : f32 to vector<2x128xf32>
    %37 = arith.maximumf %36, %29 : vector<2x128xf32>
    %38 = vector.broadcast %cst_24 : f32 to vector<2x128xf32>
    %39 = arith.minimumf %38, %37 : vector<2x128xf32>
    %40 = arith.select %35, %39, %29 : vector<2x128xi1>, vector<2x128xf32>
    %c0_25 = arith.constant 0 : index
    %c0_26 = arith.constant 0 : index
    %41 = vector.load %arg10[%c0_25, %c0_26] : memref<2x128xf32, #tpu.memory_space<vmem>>, vector<2x128xf32>
    tpu.vector_store %arg10[%c0_25, %c0_26], %40 {strides = array<i32>} : memref<2x128xf32, #tpu.memory_space<vmem>>, vector<2x128xf32>,
    return
  }
  func.func @transform_0(%arg0: i32) -> (i32, i32) {
    %c0_i32 = arith.constant 0 : i32
    %c0_i32_0 = arith.constant 0 : i32
    return %arg0, %c0_i32 : i32, i32
  }
  func.func @transform_1(%arg0: i32) -> (i32, i32) {
    %c0_i32 = arith.constant 0 : i32
    %c0_i32_0 = arith.constant 0 : i32
    %c0_i32_1 = arith.constant 0 : i32
    return %c0_i32, %c0_i32_0 : i32, i32
  }
  func.func @transform_2(%arg0: i32) -> (i32, i32) {
    %c0_i32 = arith.constant 0 : i32
    %c0_i32_0 = arith.constant 0 : i32
    %c0_i32_1 = arith.constant 0 : i32
    return %c0_i32, %c0_i32_0 : i32, i32
  }
  func.func @transform_3(%arg0: i32) -> (i32, i32) {
    %c0_i32 = arith.constant 0 : i32
    %c0_i32_0 = arith.constant 0 : i32
    %c0_i32_1 = arith.constant 0 : i32
    return %c0_i32, %c0_i32_0 : i32, i32
  }
  func.func @transform_4(%arg0: i32) -> (i32, i32) {
    %c0_i32 = arith.constant 0 : i32
    %c0_i32_0 = arith.constant 0 : i32
    %c0_i32_1 = arith.constant 0 : i32
    return %c0_i32, %c0_i32_0 : i32, i32
  }
  func.func @transform_5(%arg0: i32) -> (i32, i32) {
    %c0_i32 = arith.constant 0 : i32
    %c0_i32_0 = arith.constant 0 : i32
    %c0_i32_1 = arith.constant 0 : i32
    return %c0_i32, %c0_i32_0 : i32, i32
  }
  func.func @transform_6(%arg0: i32) -> (i32, i32) {
    %c0_i32 = arith.constant 0 : i32
    %c0_i32_0 = arith.constant 0 : i32
    %c0_i32_1 = arith.constant 0 : i32
    return %c0_i32, %c0_i32_0 : i32, i32
  }
  func.func @transform_7(%arg0: i32) -> (i32, i32) {
    %c0_i32 = arith.constant 0 : i32
    %c0_i32_0 = arith.constant 0 : i32
    %c0_i32_1 = arith.constant 0 : i32
    return %c0_i32, %c0_i32_0 : i32, i32
  }
  func.func @transform_8(%arg0: i32) -> (i32, i32) {
    %c0_i32 = arith.constant 0 : i32
    %c0_i32_0 = arith.constant 0 : i32
    %c0_i32_1 = arith.constant 0 : i32
    return %c0_i32, %c0_i32_0 : i32, i32
  }
  func.func @transform_9(%arg0: i32) -> (i32, i32) {
    %c0_i32 = arith.constant 0 : i32
    %c0_i32_0 = arith.constant 0 : i32
    return %arg0, %c0_i32 : i32, i32
  }
}

</mosaic_0001>

<llo_original>
// kernel: conv_gaussian_policy_forward.3
$region0: #{conv_gaussian_policy_forward.3}
  #allocation0 [shape = 'u32[]', space=smem, size = 0x4, offset = 0x4, fixed_abs, tag = 'smem constant byte address 0x4 - core index']
  #allocation1 [shape = 'u32[144,128]{1,0:T(1,128)}', space=vmem, size = 0x12000, scoped, tag = 'internal scratch']
  %s0 = inlined_call_operand.vmem [shape: bf16[98,36], index: 0, kind: input, shape index: {}]
  %s1 = inlined_call_operand.vmem [shape: bf16[36,64], index: 1, kind: input, shape index: {}]
  %s2 = inlined_call_operand.vmem [shape: f32[1,64], index: 2, kind: input, shape index: {}]
  %s3 = inlined_call_operand.vmem [shape: bf16[98,64], index: 3, kind: output, shape index: {}]
  %s4 = sld [smem:[#allocation0]]
  $region22: #{conv_gaussian_policy_forward.3} parent=0
    _
  %s6 = ssub.s32 1, %s4
  %s7 = scalar_select 0, %s6, %s4
  // Predicated region
  $region2: #{conv_gaussian_policy_forward.3} parent=0 // pred_check
    _
  $region3: #{conv_gaussian_policy_forward.3} parent=0 // pred_check_branch
    %9 = sbr.rel (0) target = $region5
  $region4: #{conv_gaussian_policy_forward.3} parent=0 // pred_region
    _
  $region5: #{conv_gaussian_policy_forward.3} parent=0 // pred_fallthru
    _
  // Predicated region
  $region6: #{conv_gaussian_policy_forward.3} parent=0 // pred_check
    _
  $region7: #{conv_gaussian_policy_forward.3} parent=0 // pred_check_branch
    %11 = sbr.rel (0) target = $region9
  $region8: #{conv_gaussian_policy_forward.3} parent=0 // pred_region
    _
  $region9: #{conv_gaussian_policy_forward.3} parent=0 // pred_fallthru
    _
  // Predicated region
  $region10: #{conv_gaussian_policy_forward.3} parent=0 // pred_check
    _
  $region11: #{conv_gaussian_policy_forward.3} parent=0 // pred_check_branch
    %13 = sbr.rel (0) target = $region13
  $region12: #{conv_gaussian_policy_forward.3} parent=0 // pred_region
    _
  $region13: #{conv_gaussian_policy_forward.3} parent=0 // pred_fallthru
    _
  %v15 = vld [vmem:[%s0] sm:$0xf]
  %v16 = vld [vmem:[%s0 + $0x4] sm:$0xf]
  %v17 = vld [vmem:[%s0 + $0x8] sm:$0xf]
  %v18 = vld [vmem:[%s0 + $0xc] sm:$0xf]
  %v19 = vld [vmem:[%s0 + $0x10] sm:$0xf]
  %v20 = vld [vmem:[%s0 + $0x14] sm:$0xf]
  %v21 = vld [vmem:[%s0 + $0x18] sm:$0xf]
  %v22 = vld [vmem:[%s0 + $0x1c] sm:$0xf]
  %v23 = vld [vmem:[%s0 + $0x20] sm:$0xf]
  %v24 = vld [vmem:[%s0 + $0x24] sm:$0xf]
  %v25 = vld [vmem:[%s0 + $0x28] sm:$0xf]
  %v26 = vld [vmem:[%s0 + $0x2c] sm:$0xf]
  %v27 = vld [vmem:[%s0 + $0x30] sm:$0x1]
  %v28 = vld [vmem:[%s1] sm:$0xf]
  %v29 = vld [vmem:[%s1 + $0x4] sm:$0xf]
  %v30 = vld [vmem:[%s1 + $0x8] sm:$0xf]
  %v31 = vld [vmem:[%s1 + $0xc] sm:$0xf]
  %v32 = vld [vmem:[%s1 + $0x10] sm:$0x3]
  %v33 = vld [vmem:[%s2] sm:$0x1]
  %v35 = vlaneseq
  %v36 = vshrl.u32 %v35, 7
  %v37 = vsub.s32 0, %v36
  %v38 = vrot.slane %v33, %v37
  %v53 = vunpack.c.l.b16 %v15
  %v54 = vunpack.c.l.b16 %v16
  %v55 = vunpack.c.l.b16 %v17
  %v56 = vunpack.c.l.b16 %v18
  %v57 = vunpack.c.l.b16 %v19
  %v58 = vunpack.c.l.b16 %v20
  %v59 = vunpack.c.l.b16 %v21
  %v60 = vunpack.c.l.b16 %v22
  %v61 = vunpack.c.l.b16 %v23
  %v62 = vunpack.c.l.b16 %v24
  %v63 = vunpack.c.l.b16 %v25
  %v64 = vunpack.c.l.b16 %v26
  %v65 = vunpack.c.l.b16 %v27
  %v66 = vpack.c.b16 %v54, %v53
  %v67 = vpack.c.b16 %v56, %v55
  %v68 = vpack.c.b16 %v58, %v57
  %v69 = vpack.c.b16 %v60, %v59
  %v70 = vpack.c.b16 %v62, %v61
  %v71 = vpack.c.b16 %v64, %v63
  %v72 = vpack.c.b16 %v65, %v65
  %v78 = vunpack.c.l.b16 %v28
  %v79 = vunpack.c.l.b16 %v29
  %v80 = vunpack.c.l.b16 %v30
  %v81 = vunpack.c.l.b16 %v31
  %v82 = vunpack.c.l.b16 %v32
  %v83 = vpack.c.b16 %v79, %v78
  %v84 = vpack.c.b16 %v81, %v80
  %v85 = vpack.c.b16 %v82, %v82
  %vm88 = vcmask 293888
  %v90 = vsel %vm88, %v66, 0
  %v93 = vsel %vm88, %v67, 0
  %v96 = vsel %vm88, %v68, 0
  %v99 = vsel %vm88, %v69, 0
  %v102 = vsel %vm88, %v70, 0
  %v105 = vsel %vm88, %v71, 0
  %v108 = vsel %vm88, %v72, 0
  %vm110 = vcmask 1041408
  %v112 = vsel %vm110, %v85, 0
  %114 = vmatprep.subr.bf16.mxu0 0
  %115 = vmatpush1.bf16.msra.mxu0 %v83
  %116 = vmatprep.subr.bf16.mxu0 0
  %117 = vmatpush1.bf16.msra.mxu0 %v84
  %118 = vmatprep.subr.bf16.mxu0 0
  %119 = vmatpush1.bf16.msra.mxu0 %v112
  %120 = vmatprep.subr.bf16.mxu0 0
  %121 = vmatpush1.bf16.msra.mxu0 0
  %122 = vmatprep.subr.bf16.mxu0 0
  %123 = vmatpush1.bf16.msra.mxu0 0
  %124 = vmatprep.subr.bf16.mxu0 0
  %125 = vmatpush1.bf16.msra.mxu0 0
  %126 = vmatprep.subr.bf16.mxu0 0
  %127 = vmatpush1.bf16.msra.mxu0 0
  %128 = vmatprep.subr.bf16.mxu0 0
  %129 = vmatpush1.bf16.msra.mxu0 0
  %130 = vmatprep.subr.bf16.mxu0 0
  %131 = vmatpush1.bf16.msra.mxu0 0
  %132 = vmatprep.subr.bf16.mxu0 0
  %133 = vmatpush1.bf16.msra.mxu0 0
  %134 = vmatprep.subr.bf16.mxu0 0
  %135 = vmatpush1.bf16.msra.mxu0 0
  %136 = vmatprep.subr.bf16.mxu0 0
  %137 = vmatpush1.bf16.msra.mxu0 0
  %138 = vmatprep.subr.bf16.mxu0 0
  %139 = vmatpush1.bf16.msra.mxu0 0
  %140 = vmatprep.subr.bf16.mxu0 0
  %141 = vmatpush1.bf16.msra.mxu0 0
  %142 = vmatprep.subr.bf16.mxu0 0
  %143 = vmatpush1.bf16.msra.mxu0 0
  %144 = vmatprep.subr.bf16.mxu0 0
  %145 = vmatpush1.bf16.msra.mxu0 0
  %146 = vmatprep.mubr.bf16.mxu0 0
  %147 = vmatmul.mubr.bf16.gmra.mrb[0].mxu0 %v90
  %v148 = vpop.f32.mrb[0].mxu0
  %v149 = vadd.f32 %v38, %v148
  %v150 = vpop.f32.mrb[0].mxu0
  %v151 = vpop.f32.mrb[0].mxu0
  %v152 = vadd.f32 %v38, %v151
  %v153 = vpop.f32.mrb[0].mxu0
  %154 = vmatprep.mubr.bf16.mxu0 0
  %155 = vmatmul.mubr.bf16.gmra.mrb[0].mxu0 %v93
  %v156 = vpop.f32.mrb[0].mxu0
  %v157 = vadd.f32 %v38, %v156
  %v158 = vpop.f32.mrb[0].mxu0
  %v159 = vpop.f32.mrb[0].mxu0
  %v160 = vadd.f32 %v38, %v159
  %v161 = vpop.f32.mrb[0].mxu0
  %162 = vmatprep.mubr.bf16.mxu0 0
  %163 = vmatmul.mubr.bf16.gmra.mrb[0].mxu0 %v96
  %v164 = vpop.f32.mrb[0].mxu0
  %v165 = vadd.f32 %v38, %v164
  %v166 = vpop.f32.mrb[0].mxu0
  %v167 = vpop.f32.mrb[0].mxu0
  %v168 = vadd.f32 %v38, %v167
  %v169 = vpop.f32.mrb[0].mxu0
  %170 = vmatprep.mubr.bf16.mxu0 0
  %171 = vmatmul.mubr.bf16.gmra.mrb[0].mxu0 %v99
  %v172 = vpop.f32.mrb[0].mxu0
  %v173 = vadd.f32 %v38, %v172
  %v174 = vpop.f32.mrb[0].mxu0
  %v175 = vpop.f32.mrb[0].mxu0
  %v176 = vadd.f32 %v38, %v175
  %v177 = vpop.f32.mrb[0].mxu0
  %178 = vmatprep.mubr.bf16.mxu0 0
  %179 = vmatmul.mubr.bf16.gmra.mrb[0].mxu0 %v102
  %v180 = vpop.f32.mrb[0].mxu0
  %v181 = vadd.f32 %v38, %v180
  %v182 = vpop.f32.mrb[0].mxu0
  %v183 = vpop.f32.mrb[0].mxu0
  %v184 = vadd.f32 %v38, %v183
  %v185 = vpop.f32.mrb[0].mxu0
  %186 = vmatprep.mubr.bf16.mxu0 0
  %187 = vmatmul.mubr.bf16.gmra.mrb[0].mxu0 %v105
  %v188 = vpop.f32.mrb[0].mxu0
  %v189 = vadd.f32 %v38, %v188
  %v190 = vpop.f32.mrb[0].mxu0
  %v191 = vpop.f32.mrb[0].mxu0
  %v192 = vadd.f32 %v38, %v191
  %v193 = vpop.f32.mrb[0].mxu0
  %194 = vmatprep.mubr.bf16.mxu0 0
  %195 = vmatmul.mubr.bf16.gmra.mrb[0].mxu0 %v108
  %v196 = vpop.f32.mrb[0].mxu0
  %v197 = vadd.f32 %v38, %v196
  %v198 = vpop.f32.mrb[0].mxu0
  %v199 = vpop.f32.mrb[0].mxu0
  %v200 = vpop.f32.mrb[0].mxu0
  %201 = vdwg.mxu0
  %v202 = vmax.f32 %v149, 0.0
  %v203 = vmax.f32 %v152, 0.0
  %v204 = vmax.f32 %v157, 0.0
  %v205 = vmax.f32 %v160, 0.0
  %v206 = vmax.f32 %v165, 0.0
  %v207 = vmax.f32 %v168, 0.0
  %v208 = vmax.f32 %v173, 0.0
  %v209 = vmax.f32 %v176, 0.0
  %v210 = vmax.f32 %v181, 0.0
  %v211 = vmax.f32 %v184, 0.0
  %v212 = vmax.f32 %v189, 0.0
  %v213 = vmax.f32 %v192, 0.0
  %v214 = vmax.f32 %v197, 0.0
  %v215 = vpack.c.bf16 %v203, %v202
  %v216 = vpack.c.bf16 %v205, %v204
  %v217 = vpack.c.bf16 %v207, %v206
  %v218 = vpack.c.bf16 %v209, %v208
  %v219 = vpack.c.bf16 %v211, %v210
  %v220 = vpack.c.bf16 %v213, %v212
  %v221 = vpack.c.bf16 %v214, %v214
  %v229 = vunpack.c.l.b16 %v215
  %v230 = vunpack.c.h.b16 %v215
  %v231 = vunpack.c.l.b16 %v216
  %v232 = vunpack.c.h.b16 %v216
  %v233 = vunpack.c.l.b16 %v217
  %v234 = vunpack.c.h.b16 %v217
  %v235 = vunpack.c.l.b16 %v218
  %v236 = vunpack.c.h.b16 %v218
  %v237 = vunpack.c.l.b16 %v219
  %v238 = vunpack.c.h.b16 %v219
  %v239 = vunpack.c.l.b16 %v220
  %v240 = vunpack.c.h.b16 %v220
  %v241 = vunpack.c.l.b16 %v221
  %v242 = vpack.c.b16 %v229, %v229
  %v243 = vpack.c.b16 %v230, %v230
  %v244 = vpack.c.b16 %v231, %v231
  %v245 = vpack.c.b16 %v232, %v232
  %v246 = vpack.c.b16 %v233, %v233
  %v247 = vpack.c.b16 %v234, %v234
  %v248 = vpack.c.b16 %v235, %v235
  %v249 = vpack.c.b16 %v236, %v236
  %v250 = vpack.c.b16 %v237, %v237
  %v251 = vpack.c.b16 %v238, %v238
  %v252 = vpack.c.b16 %v239, %v239
  %v253 = vpack.c.b16 %v240, %v240
  %v254 = vpack.c.b16 %v241, %v241
  %vm268 = vcmask 519168
  %269 = vst.msk [vmem:[%s3] sm:$0xf] %vm268, %v242
  %270 = vst.msk [vmem:[%s3 + $0x4] sm:$0xf] %vm268, %v243
  %271 = vst.msk [vmem:[%s3 + $0x8] sm:$0xf] %vm268, %v244
  %272 = vst.msk [vmem:[%s3 + $0xc] sm:$0xf] %vm268, %v245
  %273 = vst.msk [vmem:[%s3 + $0x10] sm:$0xf] %vm268, %v246
  %274 = vst.msk [vmem:[%s3 + $0x14] sm:$0xf] %vm268, %v247
  %275 = vst.msk [vmem:[%s3 + $0x18] sm:$0xf] %vm268, %v248
  %276 = vst.msk [vmem:[%s3 + $0x1c] sm:$0xf] %vm268, %v249
  %277 = vst.msk [vmem:[%s3 + $0x20] sm:$0xf] %vm268, %v250
  %278 = vst.msk [vmem:[%s3 + $0x24] sm:$0xf] %vm268, %v251
  %279 = vst.msk [vmem:[%s3 + $0x28] sm:$0xf] %vm268, %v252
  %280 = vst.msk [vmem:[%s3 + $0x2c] sm:$0xf] %vm268, %v253
  %vm281 = vcmask 516096
  %282 = vst.msk [vmem:[%s3 + $0x30] sm:$0x1] %vm281, %v254
  // Predicated region
  $region14: #{conv_gaussian_policy_forward.3} parent=0 // pred_check
    _
  $region15: #{conv_gaussian_policy_forward.3} parent=0 // pred_check_branch
    %284 = sbr.rel (0) target = $region17
  $region16: #{conv_gaussian_policy_forward.3} parent=0 // pred_region
    _
  $region17: #{conv_gaussian_policy_forward.3} parent=0 // pred_fallthru
    _
  // Predicated region
  $region18: #{conv_gaussian_policy_forward.3} parent=0 // pred_check
    _
  $region19: #{conv_gaussian_policy_forward.3} parent=0 // pred_check_branch
    %286 = sbr.rel (0) target = $region21
  $region20: #{conv_gaussian_policy_forward.3} parent=0 // pred_region
    _
  $region21: #{conv_gaussian_policy_forward.3} parent=0 // pred_fallthru
    _

// kernel: conv_gaussian_policy_forward.4
$region0: #{conv_gaussian_policy_forward.4}
  #allocation0 [shape = 'u32[]', space=smem, size = 0x4, offset = 0x4, fixed_abs, tag = 'smem constant byte address 0x4 - core index']
  #allocation1 [shape = 'u32[144,128]{1,0:T(1,128)}', space=vmem, size = 0x12000, scoped, tag = 'internal scratch']
  %s0 = inlined_call_operand.vmem [shape: bf16[18,576], index: 0, kind: input, shape index: {}]
  %s1 = inlined_call_operand.vmem [shape: bf16[576,64], index: 1, kind: input, shape index: {}]
  %s2 = inlined_call_operand.vmem [shape: f32[1,64], index: 2, kind: input, shape index: {}]
  %s3 = inlined_call_operand.vmem [shape: bf16[18,64], index: 3, kind: output, shape index: {}]
  %s4 = sld [smem:[#allocation0]]
  $region22: #{conv_gaussian_policy_forward.4} parent=0
    _
  %s6 = ssub.s32 1, %s4
  %s7 = scalar_select 0, %s6, %s4
  // Predicated region
  $region2: #{conv_gaussian_policy_forward.4} parent=0 // pred_check
    _
  $region3: #{conv_gaussian_policy_forward.4} parent=0 // pred_check_branch
    %9 = sbr.rel (0) target = $region5
  $region4: #{conv_gaussian_policy_forward.4} parent=0 // pred_region
    _
  $region5: #{conv_gaussian_policy_forward.4} parent=0 // pred_fallthru
    _
  // Predicated region
  $region6: #{conv_gaussian_policy_forward.4} parent=0 // pred_check
    _
  $region7: #{conv_gaussian_policy_forward.4} parent=0 // pred_check_branch
    %11 = sbr.rel (0) target = $region9
  $region8: #{conv_gaussian_policy_forward.4} parent=0 // pred_region
    _
  $region9: #{conv_gaussian_policy_forward.4} parent=0 // pred_fallthru
    _
  // Predicated region
  $region10: #{conv_gaussian_policy_forward.4} parent=0 // pred_check
    _
  $region11: #{conv_gaussian_policy_forward.4} parent=0 // pred_check_branch
    %13 = sbr.rel (0) target = $region13
  $region12: #{conv_gaussian_policy_forward.4} parent=0 // pred_region
    _
  $region13: #{conv_gaussian_policy_forward.4} parent=0 // pred_fallthru
    _
  %v15 = vld [vmem:[%s0] sm:$0xff]
  %v16 = vld [vmem:[%s0 + $0x8] sm:$0xff]
  %v17 = vld [vmem:[%s0 + $0x10] sm:$0xf]
  %v18 = vld [vmem:[%s0 + $0x14] sm:$0xff]
  %v19 = vld [vmem:[%s0 + $0x1c] sm:$0xff]
  %v20 = vld [vmem:[%s0 + $0x24] sm:$0xf]
  %v21 = vld [vmem:[%s0 + $0x28] sm:$0x11]
  %v22 = vld [vmem:[%s0 + $0x30] sm:$0x11]
  %v23 = vld [vmem:[%s0 + $0x38] sm:$0x1]
  %v24 = vld [vmem:[%s1] sm:$0xf]
  %v25 = vld [vmem:[%s1 + $0x4] sm:$0xf]
  %v26 = vld [vmem:[%s1 + $0x8] sm:$0xf]
  %v27 = vld [vmem:[%s1 + $0xc] sm:$0xf]
  %v28 = vld [vmem:[%s1 + $0x10] sm:$0xf]
  %v29 = vld [vmem:[%s1 + $0x14] sm:$0xf]
  %v30 = vld [vmem:[%s1 + $0x18] sm:$0xf]
  %v31 = vld [vmem:[%s1 + $0x1c] sm:$0xf]
  %v32 = vld [vmem:[%s1 + $0x20] sm:$0xf]
  %v33 = vld [vmem:[%s1 + $0x24] sm:$0xf]
  %v34 = vld [vmem:[%s1 + $0x28] sm:$0xf]
  %v35 = vld [vmem:[%s1 + $0x2c] sm:$0xf]
  %v36 = vld [vmem:[%s1 + $0x30] sm:$0xf]
  %v37 = vld [vmem:[%s1 + $0x34] sm:$0xf]
  %v38 = vld [vmem:[%s1 + $0x38] sm:$0xf]
  %v39 = vld [vmem:[%s1 + $0x3c] sm:$0xf]
  %v40 = vld [vmem:[%s1 + $0x40] sm:$0xf]
  %v41 = vld [vmem:[%s1 + $0x44] sm:$0xf]
  %v42 = vld [vmem:[%s1 + $0x48] sm:$0xf]
  %v43 = vld [vmem:[%s1 + $0x4c] sm:$0xf]
  %v44 = vld [vmem:[%s1 + $0x50] sm:$0xf]
  %v45 = vld [vmem:[%s1 + $0x54] sm:$0xf]
  %v46 = vld [vmem:[%s1 + $0x58] sm:$0xf]
  %v47 = vld [vmem:[%s1 + $0x5c] sm:$0xf]
  %v48 = vld [vmem:[%s1 + $0x60] sm:$0xf]
  %v49 = vld [vmem:[%s1 + $0x64] sm:$0xf]
  %v50 = vld [vmem:[%s1 + $0x68] sm:$0xf]
  %v51 = vld [vmem:[%s1 + $0x6c] sm:$0xf]
  %v52 = vld [vmem:[%s1 + $0x70] sm:$0xf]
  %v53 = vld [vmem:[%s1 + $0x74] sm:$0xf]
  %v54 = vld [vmem:[%s1 + $0x78] sm:$0xf]
  %v55 = vld [vmem:[%s1 + $0x7c] sm:$0xf]
  %v56 = vld [vmem:[%s1 + $0x80] sm:$0xf]
  %v57 = vld [vmem:[%s1 + $0x84] sm:$0xf]
  %v58 = vld [vmem:[%s1 + $0x88] sm:$0xf]
  %v59 = vld [vmem:[%s1 + $0x8c] sm:$0xf]
  %v60 = vld [vmem:[%s1 + $0x90] sm:$0xf]
  %v61 = vld [vmem:[%s1 + $0x94] sm:$0xf]
  %v62 = vld [vmem:[%s1 + $0x98] sm:$0xf]
  %v63 = vld [vmem:[%s1 + $0x9c] sm:$0xf]
  %v64 = vld [vmem:[%s1 + $0xa0] sm:$0xf]
  %v65 = vld [vmem:[%s1 + $0xa4] sm:$0xf]
  %v66 = vld [vmem:[%s1 + $0xa8] sm:$0xf]
  %v67 = vld [vmem:[%s1 + $0xac] sm:$0xf]
  %v68 = vld [vmem:[%s1 + $0xb0] sm:$0xf]
  %v69 = vld [vmem:[%s1 + $0xb4] sm:$0xf]
  %v70 = vld [vmem:[%s1 + $0xb8] sm:$0xf]
  %v71 = vld [vmem:[%s1 + $0xbc] sm:$0xf]
  %v72 = vld [vmem:[%s1 + $0xc0] sm:$0xf]
  %v73 = vld [vmem:[%s1 + $0xc4] sm:$0xf]
  %v74 = vld [vmem:[%s1 + $0xc8] sm:$0xf]
  %v75 = vld [vmem:[%s1 + $0xcc] sm:$0xf]
  %v76 = vld [vmem:[%s1 + $0xd0] sm:$0xf]
  %v77 = vld [vmem:[%s1 + $0xd4] sm:$0xf]
  %v78 = vld [vmem:[%s1 + $0xd8] sm:$0xf]
  %v79 = vld [vmem:[%s1 + $0xdc] sm:$0xf]
  %v80 = vld [vmem:[%s1 + $0xe0] sm:$0xf]
  %v81 = vld [vmem:[%s1 + $0xe4] sm:$0xf]
  %v82 = vld [vmem:[%s1 + $0xe8] sm:$0xf]
  %v83 = vld [vmem:[%s1 + $0xec] sm:$0xf]
  %v84 = vld [vmem:[%s1 + $0xf0] sm:$0xf]
  %v85 = vld [vmem:[%s1 + $0xf4] sm:$0xf]
  %v86 = vld [vmem:[%s1 + $0xf8] sm:$0xf]
  %v87 = vld [vmem:[%s1 + $0xfc] sm:$0xf]
  %v88 = vld [vmem:[%s1 + $0x100] sm:$0xf]
  %v89 = vld [vmem:[%s1 + $0x104] sm:$0xf]
  %v90 = vld [vmem:[%s1 + $0x108] sm:$0xf]
  %v91 = vld [vmem:[%s1 + $0x10c] sm:$0xf]
  %v92 = vld [vmem:[%s1 + $0x110] sm:$0xf]
  %v93 = vld [vmem:[%s1 + $0x114] sm:$0xf]
  %v94 = vld [vmem:[%s1 + $0x118] sm:$0xf]
  %v95 = vld [vmem:[%s1 + $0x11c] sm:$0xf]
  %v96 = vld [vmem:[%s2] sm:$0x1]
  %v98 = vlaneseq
  %v99 = vshrl.u32 %v98, 7
  %v100 = vsub.s32 0, %v99
  %v101 = vrot.slane %v96, %v100
  %v112 = vunpack.c.l.b16 %v15
  %v113 = vunpack.c.h.b16 %v15
  %v114 = vunpack.c.l.b16 %v16
  %v115 = vunpack.c.h.b16 %v16
  %v116 = vunpack.c.l.b16 %v17
  %v117 = vunpack.c.l.b16 %v18
  %v118 = vunpack.c.h.b16 %v18
  %v119 = vunpack.c.l.b16 %v19
  %v120 = vunpack.c.h.b16 %v19
  %v121 = vunpack.c.l.b16 %v20
  %v122 = vunpack.c.l.b16 %v21
  %v123 = vunpack.c.h.b16 %v21
  %v124 = vunpack.c.l.b16 %v22
  %v125 = vunpack.c.h.b16 %v22
  %v126 = vunpack.c.l.b16 %v23
  %v127 = vpack.c.b16 %v117, %v112
  %v128 = vpack.c.b16 %v118, %v113
  %v129 = vpack.c.b16 %v119, %v114
  %v130 = vpack.c.b16 %v120, %v115
  %v131 = vpack.c.b16 %v121, %v116
  %v132 = vpack.c.b16 %v122, %v122
  %v133 = vpack.c.b16 %v123, %v123
  %v134 = vpack.c.b16 %v124, %v124
  %v135 = vpack.c.b16 %v125, %v125
  %v136 = vpack.c.b16 %v126, %v126
  %v217 = vunpack.c.l.b16 %v24
  %v218 = vunpack.c.l.b16 %v25
  %v219 = vunpack.c.l.b16 %v26
  %v220 = vunpack.c.l.b16 %v27
  %v221 = vunpack.c.l.b16 %v28
  %v222 = vunpack.c.l.b16 %v29
  %v223 = vunpack.c.l.b16 %v30
  %v224 = vunpack.c.l.b16 %v31
  %v225 = vunpack.c.l.b16 %v32
  %v226 = vunpack.c.l.b16 %v33
  %v227 = vunpack.c.l.b16 %v34
  %v228 = vunpack.c.l.b16 %v35
  %v229 = vunpack.c.l.b16 %v36
  %v230 = vunpack.c.l.b16 %v37
  %v231 = vunpack.c.l.b16 %v38
  %v232 = vunpack.c.l.b16 %v39
  %v233 = vunpack.c.l.b16 %v40
  %v234 = vunpack.c.l.b16 %v41
  %v235 = vunpack.c.l.b16 %v42
  %v236 = vunpack.c.l.b16 %v43
  %v237 = vunpack.c.l.b16 %v44
  %v238 = vunpack.c.l.b16 %v45
  %v239 = vunpack.c.l.b16 %v46
  %v240 = vunpack.c.l.b16 %v47
  %v241 = vunpack.c.l.b16 %v48
  %v242 = vunpack.c.l.b16 %v49
  %v243 = vunpack.c.l.b16 %v50
  %v244 = vunpack.c.l.b16 %v51
  %v245 = vunpack.c.l.b16 %v52
  %v246 = vunpack.c.l.b16 %v53
  %v247 = vunpack.c.l.b16 %v54
  %v248 = vunpack.c.l.b16 %v55
  %v249 = vunpack.c.l.b16 %v56
  %v250 = vunpack.c.l.b16 %v57
  %v251 = vunpack.c.l.b16 %v58
  %v252 = vunpack.c.l.b16 %v59
  %v253 = vunpack.c.l.b16 %v60
  %v254 = vunpack.c.l.b16 %v61
  %v255 = vunpack.c.l.b16 %v62
  %v256 = vunpack.c.l.b16 %v63
  %v257 = vunpack.c.l.b16 %v64
  %v258 = vunpack.c.l.b16 %v65
  %v259 = vunpack.c.l.b16 %v66
  %v260 = vunpack.c.l.b16 %v67
  %v261 = vunpack.c.l.b16 %v68
  %v262 = vunpack.c.l.b16 %v69
  %v263 = vunpack.c.l.b16 %v70
  %v264 = vunpack.c.l.b16 %v71
  %v265 = vunpack.c.l.b16 %v72
  %v266 = vunpack.c.l.b16 %v73
  %v267 = vunpack.c.l.b16 %v74
  %v268 = vunpack.c.l.b16 %v75
  %v269 = vunpack.c.l.b16 %v76
  %v270 = vunpack.c.l.b16 %v77
  %v271 = vunpack.c.l.b16 %v78
  %v272 = vunpack.c.l.b16 %v79
  %v273 = vunpack.c.l.b16 %v80
  %v274 = vunpack.c.l.b16 %v81
  %v275 = vunpack.c.l.b16 %v82
  %v276 = vunpack.c.l.b16 %v83
  %v277 = vunpack.c.l.b16 %v84
  %v278 = vunpack.c.l.b16 %v85
  %v279 = vunpack.c.l.b16 %v86
  %v280 = vunpack.c.l.b16 %v87
  %v281 = vunpack.c.l.b16 %v88
  %v282 = vunpack.c.l.b16 %v89
  %v283 = vunpack.c.l.b16 %v90
  %v284 = vunpack.c.l.b16 %v91
  %v285 = vunpack.c.l.b16 %v92
  %v286 = vunpack.c.l.b16 %v93
  %v287 = vunpack.c.l.b16 %v94
  %v288 = vunpack.c.l.b16 %v95
  %v289 = vpack.c.b16 %v218, %v217
  %v290 = vpack.c.b16 %v220, %v219
  %v291 = vpack.c.b16 %v222, %v221
  %v292 = vpack.c.b16 %v224, %v223
  %v293 = vpack.c.b16 %v226, %v225
  %v294 = vpack.c.b16 %v228, %v227
  %v295 = vpack.c.b16 %v230, %v229
  %v296 = vpack.c.b16 %v232, %v231
  %v297 = vpack.c.b16 %v234, %v233
  %v298 = vpack.c.b16 %v236, %v235
  %v299 = vpack.c.b16 %v238, %v237
  %v300 = vpack.c.b16 %v240, %v239
  %v301 = vpack.c.b16 %v242, %v241
  %v302 = vpack.c.b16 %v244, %v243
  %v303 = vpack.c.b16 %v246, %v245
  %v304 = vpack.c.b16 %v248, %v247
  %v305 = vpack.c.b16 %v250, %v249
  %v306 = vpack.c.b16 %v252, %v251
  %v307 = vpack.c.b16 %v254, %v253
  %v308 = vpack.c.b16 %v256, %v255
  %v309 = vpack.c.b16 %v258, %v257
  %v310 = vpack.c.b16 %v260, %v259
  %v311 = vpack.c.b16 %v262, %v261
  %v312 = vpack.c.b16 %v264, %v263
  %v313 = vpack.c.b16 %v266, %v265
  %v314 = vpack.c.b16 %v268, %v267
  %v315 = vpack.c.b16 %v270, %v269
  %v316 = vpack.c.b16 %v272, %v271
  %v317 = vpack.c.b16 %v274, %v273
  %v318 = vpack.c.b16 %v276, %v275
  %v319 = vpack.c.b16 %v278, %v277
  %v320 = vpack.c.b16 %v280, %v279
  %v321 = vpack.c.b16 %v282, %v281
  %v322 = vpack.c.b16 %v284, %v283
  %v323 = vpack.c.b16 %v286, %v285
  %v324 = vpack.c.b16 %v288, %v287
  %vm361 = vcmask 523264
  %v363 = vsel %vm361, %v131, 0
  %v366 = vsel %vm361, %v136, 0
  %368 = vmatprep.subr.bf16.mxu0 0
  %369 = vmatpush1.bf16.msra.mxu0 %v289
  %370 = vmatprep.subr.bf16.mxu0 0
  %371 = vmatpush1.bf16.msra.mxu0 %v290
  %372 = vmatprep.subr.bf16.mxu0 0
  %373 = vmatpush1.bf16.msra.mxu0 %v291
  %374 = vmatprep.subr.bf16.mxu0 0
  %375 = vmatpush1.bf16.msra.mxu0 %v292
  %376 = vmatprep.subr.bf16.mxu0 0
  %377 = vmatpush1.bf16.msra.mxu0 %v293
  %378 = vmatprep.subr.bf16.mxu0 0
  %379 = vmatpush1.bf16.msra.mxu0 %v294
  %380 = vmatprep.subr.bf16.mxu0 0
  %381 = vmatpush1.bf16.msra.mxu0 %v295
  %382 = vmatprep.subr.bf16.mxu0 0
  %383 = vmatpush1.bf16.msra.mxu0 %v296
  %384 = vmatprep.subr.bf16.mxu0 0
  %385 = vmatpush1.bf16.msra.mxu0 %v297
  %386 = vmatprep.subr.bf16.mxu0 0
  %387 = vmatpush1.bf16.msra.mxu0 %v298
  %388 = vmatprep.subr.bf16.mxu0 0
  %389 = vmatpush1.bf16.msra.mxu0 %v299
  %390 = vmatprep.subr.bf16.mxu0 0
  %391 = vmatpush1.bf16.msra.mxu0 %v300
  %392 = vmatprep.subr.bf16.mxu0 0
  %393 = vmatpush1.bf16.msra.mxu0 %v301
  %394 = vmatprep.subr.bf16.mxu0 0
  %395 = vmatpush1.bf16.msra.mxu0 %v302
  %396 = vmatprep.subr.bf16.mxu0 0
  %397 = vmatpush1.bf16.msra.mxu0 %v303
  %398 = vmatprep.subr.bf16.mxu0 0
  %399 = vmatpush1.bf16.msra.mxu0 %v304
  %400 = vmatprep.mubr.bf16.mxu0 %v128
  %401 = vmatmul.mubr.bf16.gmra.mrb[0].mxu0 %v127
  %v402 = vpop.f32.mrb[0].mxu0
  %v403 = vadd.f32 %v101, %v402
  %v404 = vpop.f32.mrb[0].mxu0
  %v405 = vpop.f32.mrb[0].mxu0
  %v406 = vadd.f32 %v101, %v405
  %v407 = vpop.f32.mrb[0].mxu0
  %408 = vmatprep.mubr.bf16.mxu0 %v133
  %409 = vmatmul.mubr.bf16.gmra.mrb[0].mxu0 %v132
  %v410 = vpop.f32.mrb[0].mxu0
  %v411 = vadd.f32 %v101, %v410
  %v412 = vpop.f32.mrb[0].mxu0
  %v413 = vpop.f32.mrb[0].mxu0
  %v414 = vpop.f32.mrb[0].mxu0
  %415 = vdwg.mxu0
  %416 = vmatprep.subr.bf16.mxu0 0
  %417 = vmatpush1.bf16.msra.mxu0 %v305
  %418 = vmatprep.subr.bf16.mxu0 0
  %419 = vmatpush1.bf16.msra.mxu0 %v306
  %420 = vmatprep.subr.bf16.mxu0 0
  %421 = vmatpush1.bf16.msra.mxu0 %v307
  %422 = vmatprep.subr.bf16.mxu0 0
  %423 = vmatpush1.bf16.msra.mxu0 %v308
  %424 = vmatprep.subr.bf16.mxu0 0
  %425 = vmatpush1.bf16.msra.mxu0 %v309
  %426 = vmatprep.subr.bf16.mxu0 0
  %427 = vmatpush1.bf16.msra.mxu0 %v310
  %428 = vmatprep.subr.bf16.mxu0 0
  %429 = vmatpush1.bf16.msra.mxu0 %v311
  %430 = vmatprep.subr.bf16.mxu0 0
  %431 = vmatpush1.bf16.msra.mxu0 %v312
  %432 = vmatprep.subr.bf16.mxu0 0
  %433 = vmatpush1.bf16.msra.mxu0 %v313
  %434 = vmatprep.subr.bf16.mxu0 0
  %435 = vmatpush1.bf16.msra.mxu0 %v314
  %436 = vmatprep.subr.bf16.mxu0 0
  %437 = vmatpush1.bf16.msra.mxu0 %v315
  %438 = vmatprep.subr.bf16.mxu0 0
  %439 = vmatpush1.bf16.msra.mxu0 %v316
  %440 = vmatprep.subr.bf16.mxu0 0
  %441 = vmatpush1.bf16.msra.mxu0 %v317
  %442 = vmatprep.subr.bf16.mxu0 0
  %443 = vmatpush1.bf16.msra.mxu0 %v318
  %444 = vmatprep.subr.bf16.mxu0 0
  %445 = vmatpush1.bf16.msra.mxu0 %v319
  %446 = vmatprep.subr.bf16.mxu0 0
  %447 = vmatpush1.bf16.msra.mxu0 %v320
  %448 = vmatprep.mubr.bf16.mxu0 %v130
  %449 = vmatmul.mubr.bf16.gmra.mrb[0].mxu0 %v129
  %v450 = vpop.f32.mrb[0].mxu0
  %v451 = vadd.f32 %v403, %v450
  %v452 = vpop.f32.mrb[0].mxu0
  %v453 = vpop.f32.mrb[0].mxu0
  %v454 = vadd.f32 %v406, %v453
  %v455 = vpop.f32.mrb[0].mxu0
  %456 = vmatprep.mubr.bf16.mxu0 %v135
  %457 = vmatmul.mubr.bf16.gmra.mrb[0].mxu0 %v134
  %v458 = vpop.f32.mrb[0].mxu0
  %v459 = vadd.f32 %v411, %v458
  %v460 = vpop.f32.mrb[0].mxu0
  %v461 = vpop.f32.mrb[0].mxu0
  %v462 = vpop.f32.mrb[0].mxu0
  %463 = vdwg.mxu0
  %464 = vmatprep.subr.bf16.mxu0 0
  %465 = vmatpush1.bf16.msra.mxu0 %v321
  %466 = vmatprep.subr.bf16.mxu0 0
  %467 = vmatpush1.bf16.msra.mxu0 %v322
  %468 = vmatprep.subr.bf16.mxu0 0
  %469 = vmatpush1.bf16.msra.mxu0 %v323
  %470 = vmatprep.subr.bf16.mxu0 0
  %471 = vmatpush1.bf16.msra.mxu0 %v324
  %472 = vmatprep.subr.bf16.mxu0 0
  %473 = vmatpush1.bf16.msra.mxu0 0
  %474 = vmatprep.subr.bf16.mxu0 0
  %475 = vmatpush1.bf16.msra.mxu0 0
  %476 = vmatprep.subr.bf16.mxu0 0
  %477 = vmatpush1.bf16.msra.mxu0 0
  %478 = vmatprep.subr.bf16.mxu0 0
  %479 = vmatpush1.bf16.msra.mxu0 0
  %480 = vmatprep.subr.bf16.mxu0 0
  %481 = vmatpush1.bf16.msra.mxu0 0
  %482 = vmatprep.subr.bf16.mxu0 0
  %483 = vmatpush1.bf16.msra.mxu0 0
  %484 = vmatprep.subr.bf16.mxu0 0
  %485 = vmatpush1.bf16.msra.mxu0 0
  %486 = vmatprep.subr.bf16.mxu0 0
  %487 = vmatpush1.bf16.msra.mxu0 0
  %488 = vmatprep.subr.bf16.mxu0 0
  %489 = vmatpush1.bf16.msra.mxu0 0
  %490 = vmatprep.subr.bf16.mxu0 0
  %491 = vmatpush1.bf16.msra.mxu0 0
  %492 = vmatprep.subr.bf16.mxu0 0
  %493 = vmatpush1.bf16.msra.mxu0 0
  %494 = vmatprep.subr.bf16.mxu0 0
  %495 = vmatpush1.bf16.msra.mxu0 0
  %496 = vmatprep.mubr.bf16.mxu0 0
  %497 = vmatmul.mubr.bf16.gmra.mrb[0].mxu0 %v363
  %v498 = vpop.f32.mrb[0].mxu0
  %v499 = vadd.f32 %v451, %v498
  %v500 = vpop.f32.mrb[0].mxu0
  %v501 = vpop.f32.mrb[0].mxu0
  %v502 = vadd.f32 %v454, %v501
  %v503 = vpop.f32.mrb[0].mxu0
  %504 = vmatprep.mubr.bf16.mxu0 0
  %505 = vmatmul.mubr.bf16.gmra.mrb[0].mxu0 %v366
  %v506 = vpop.f32.mrb[0].mxu0
  %v507 = vadd.f32 %v459, %v506
  %v508 = vpop.f32.mrb[0].mxu0
  %v509 = vpop.f32.mrb[0].mxu0
  %v510 = vpop.f32.mrb[0].mxu0
  %511 = vdwg.mxu0
  %v512 = vmax.f32 %v499, 0.0
  %v513 = vmax.f32 %v502, 0.0
  %v514 = vmax.f32 %v507, 0.0
  %v515 = vpack.c.bf16 %v513, %v512
  %v516 = vpack.c.bf16 %v514, %v514
  %v519 = vunpack.c.l.b16 %v515
  %v520 = vunpack.c.h.b16 %v515
  %v521 = vunpack.c.l.b16 %v516
  %v522 = vpack.c.b16 %v519, %v519
  %v523 = vpack.c.b16 %v520, %v520
  %v524 = vpack.c.b16 %v521, %v521
  %vm528 = vcmask 519168
  %529 = vst.msk [vmem:[%s3] sm:$0xf] %vm528, %v522
  %530 = vst.msk [vmem:[%s3 + $0x4] sm:$0xf] %vm528, %v523
  %vm531 = vcmask 516096
  %532 = vst.msk [vmem:[%s3 + $0x8] sm:$0x1] %vm531, %v524
  // Predicated region
  $region14: #{conv_gaussian_policy_forward.4} parent=0 // pred_check
    _
  $region15: #{conv_gaussian_policy_forward.4} parent=0 // pred_check_branch
    %534 = sbr.rel (0) target = $region17
  $region16: #{conv_gaussian_policy_forward.4} parent=0 // pred_region
    _
  $region17: #{conv_gaussian_policy_forward.4} parent=0 // pred_fallthru
    _
  // Predicated region
  $region18: #{conv_gaussian_policy_forward.4} parent=0 // pred_check
    _
  $region19: #{conv_gaussian_policy_forward.4} parent=0 // pred_check_branch
    %536 = sbr.rel (0) target = $region21
  $region20: #{conv_gaussian_policy_forward.4} parent=0 // pred_region
    _
  $region21: #{conv_gaussian_policy_forward.4} parent=0 // pred_fallthru
    _

// kernel: conv_gaussian_policy_forward.5
$region0: #{conv_gaussian_policy_forward.5}
  #allocation0 [shape = 'u32[]', space=smem, size = 0x4, offset = 0x4, fixed_abs, tag = 'smem constant byte address 0x4 - core index']
  #allocation1 [shape = 'u32[144,128]{1,0:T(1,128)}', space=vmem, size = 0x12000, scoped, tag = 'internal scratch']
  %s0 = inlined_call_operand.vmem [shape: bf16[2,576], index: 0, kind: input, shape index: {}]
  %s1 = inlined_call_operand.vmem [shape: bf16[576,64], index: 1, kind: input, shape index: {}]
  %s2 = inlined_call_operand.vmem [shape: f32[1,64], index: 2, kind: input, shape index: {}]
  %s3 = inlined_call_operand.vmem [shape: bf16[64,32], index: 3, kind: input, shape index: {}]
  %s4 = inlined_call_operand.vmem [shape: f32[1,32], index: 4, kind: input, shape index: {}]
  %s5 = inlined_call_operand.vmem [shape: bf16[32,32], index: 5, kind: input, shape index: {}]
  %s6 = inlined_call_operand.vmem [shape: f32[1,32], index: 6, kind: input, shape index: {}]
  %s7 = inlined_call_operand.vmem [shape: bf16[32,128], index: 7, kind: input, shape index: {}]
  %s8 = inlined_call_operand.vmem [shape: f32[1,128], index: 8, kind: input, shape index: {}]
  %s9 = inlined_call_operand.vmem [shape: f32[2,128], index: 9, kind: output, shape index: {}]
  %s10 = sld [smem:[#allocation0]]
  $region46: #{conv_gaussian_policy_forward.5} parent=0
    _
  %s12 = ssub.s32 1, %s10
  %s13 = scalar_select 0, %s12, %s10
  // Predicated region
  $region2: #{conv_gaussian_policy_forward.5} parent=0 // pred_check
    _
  $region3: #{conv_gaussian_policy_forward.5} parent=0 // pred_check_branch
    %15 = sbr.rel (0) target = $region5
  $region4: #{conv_gaussian_policy_forward.5} parent=0 // pred_region
    _
  $region5: #{conv_gaussian_policy_forward.5} parent=0 // pred_fallthru
    _
  // Predicated region
  $region6: #{conv_gaussian_policy_forward.5} parent=0 // pred_check
    _
  $region7: #{conv_gaussian_policy_forward.5} parent=0 // pred_check_branch
    %17 = sbr.rel (0) target = $region9
  $region8: #{conv_gaussian_policy_forward.5} parent=0 // pred_region
    _
  $region9: #{conv_gaussian_policy_forward.5} parent=0 // pred_fallthru
    _
  // Predicated region
  $region10: #{conv_gaussian_policy_forward.5} parent=0 // pred_check
    _
  $region11: #{conv_gaussian_policy_forward.5} parent=0 // pred_check_branch
    %19 = sbr.rel (0) target = $region13
  $region12: #{conv_gaussian_policy_forward.5} parent=0 // pred_region
    _
  $region13: #{conv_gaussian_policy_forward.5} parent=0 // pred_fallthru
    _
  // Predicated region
  $region14: #{conv_gaussian_policy_forward.5} parent=0 // pred_check
    _
  $region15: #{conv_gaussian_policy_forward.5} parent=0 // pred_check_branch
    %21 = sbr.rel (0) target = $region17
  $region16: #{conv_gaussian_policy_forward.5} parent=0 // pred_region
    _
  $region17: #{conv_gaussian_policy_forward.5} parent=0 // pred_fallthru
    _
  // Predicated region
  $region18: #{conv_gaussian_policy_forward.5} parent=0 // pred_check
    _
  $region19: #{conv_gaussian_policy_forward.5} parent=0 // pred_check_branch
    %23 = sbr.rel (0) target = $region21
  $region20: #{conv_gaussian_policy_forward.5} parent=0 // pred_region
    _
  $region21: #{conv_gaussian_policy_forward.5} parent=0 // pred_fallthru
    _
  // Predicated region
  $region22: #{conv_gaussian_policy_forward.5} parent=0 // pred_check
    _
  $region23: #{conv_gaussian_policy_forward.5} parent=0 // pred_check_branch
    %25 = sbr.rel (0) target = $region25
  $region24: #{conv_gaussian_policy_forward.5} parent=0 // pred_region
    _
  $region25: #{conv_gaussian_policy_forward.5} parent=0 // pred_fallthru
    _
  // Predicated region
  $region26: #{conv_gaussian_policy_forward.5} parent=0 // pred_check
    _
  $region27: #{conv_gaussian_policy_forward.5} parent=0 // pred_check_branch
    %27 = sbr.rel (0) target = $region29
  $region28: #{conv_gaussian_policy_forward.5} parent=0 // pred_region
    _
  $region29: #{conv_gaussian_policy_forward.5} parent=0 // pred_fallthru
    _
  // Predicated region
  $region30: #{conv_gaussian_policy_forward.5} parent=0 // pred_check
    _
  $region31: #{conv_gaussian_policy_forward.5} parent=0 // pred_check_branch
    %29 = sbr.rel (0) target = $region33
  $region32: #{conv_gaussian_policy_forward.5} parent=0 // pred_region
    _
  $region33: #{conv_gaussian_policy_forward.5} parent=0 // pred_fallthru
    _
  // Predicated region
  $region34: #{conv_gaussian_policy_forward.5} parent=0 // pred_check
    _
  $region35: #{conv_gaussian_policy_forward.5} parent=0 // pred_check_branch
    %31 = sbr.rel (0) target = $region37
  $region36: #{conv_gaussian_policy_forward.5} parent=0 // pred_region
    _
  $region37: #{conv_gaussian_policy_forward.5} parent=0 // pred_fallthru
    _
  %v33 = vld [vmem:[%s0] sm:$0x1f]
  %v34 = vld [vmem:[%s1] sm:$0xf]
  %v35 = vld [vmem:[%s1 + $0x4] sm:$0xf]
  %v36 = vld [vmem:[%s1 + $0x8] sm:$0xf]
  %v37 = vld [vmem:[%s1 + $0xc] sm:$0xf]
  %v38 = vld [vmem:[%s1 + $0x10] sm:$0xf]
  %v39 = vld [vmem:[%s1 + $0x14] sm:$0xf]
  %v40 = vld [vmem:[%s1 + $0x18] sm:$0xf]
  %v41 = vld [vmem:[%s1 + $0x1c] sm:$0xf]
  %v42 = vld [vmem:[%s1 + $0x20] sm:$0xf]
  %v43 = vld [vmem:[%s1 + $0x24] sm:$0xf]
  %v44 = vld [vmem:[%s1 + $0x28] sm:$0xf]
  %v45 = vld [vmem:[%s1 + $0x2c] sm:$0xf]
  %v46 = vld [vmem:[%s1 + $0x30] sm:$0xf]
  %v47 = vld [vmem:[%s1 + $0x34] sm:$0xf]
  %v48 = vld [vmem:[%s1 + $0x38] sm:$0xf]
  %v49 = vld [vmem:[%s1 + $0x3c] sm:$0xf]
  %v50 = vld [vmem:[%s1 + $0x40] sm:$0xf]
  %v51 = vld [vmem:[%s1 + $0x44] sm:$0xf]
  %v52 = vld [vmem:[%s1 + $0x48] sm:$0xf]
  %v53 = vld [vmem:[%s1 + $0x4c] sm:$0xf]
  %v54 = vld [vmem:[%s1 + $0x50] sm:$0xf]
  %v55 = vld [vmem:[%s1 + $0x54] sm:$0xf]
  %v56 = vld [vmem:[%s1 + $0x58] sm:$0xf]
  %v57 = vld [vmem:[%s1 + $0x5c] sm:$0xf]
  %v58 = vld [vmem:[%s1 + $0x60] sm:$0xf]
  %v59 = vld [vmem:[%s1 + $0x64] sm:$0xf]
  %v60 = vld [vmem:[%s1 + $0x68] sm:$0xf]
  %v61 = vld [vmem:[%s1 + $0x6c] sm:$0xf]
  %v62 = vld [vmem:[%s1 + $0x70] sm:$0xf]
  %v63 = vld [vmem:[%s1 + $0x74] sm:$0xf]
  %v64 = vld [vmem:[%s1 + $0x78] sm:$0xf]
  %v65 = vld [vmem:[%s1 + $0x7c] sm:$0xf]
  %v66 = vld [vmem:[%s1 + $0x80] sm:$0xf]
  %v67 = vld [vmem:[%s1 + $0x84] sm:$0xf]
  %v68 = vld [vmem:[%s1 + $0x88] sm:$0xf]
  %v69 = vld [vmem:[%s1 + $0x8c] sm:$0xf]
  %v70 = vld [vmem:[%s1 + $0x90] sm:$0xf]
  %v71 = vld [vmem:[%s1 + $0x94] sm:$0xf]
  %v72 = vld [vmem:[%s1 + $0x98] sm:$0xf]
  %v73 = vld [vmem:[%s1 + $0x9c] sm:$0xf]
  %v74 = vld [vmem:[%s1 + $0xa0] sm:$0xf]
  %v75 = vld [vmem:[%s1 + $0xa4] sm:$0xf]
  %v76 = vld [vmem:[%s1 + $0xa8] sm:$0xf]
  %v77 = vld [vmem:[%s1 + $0xac] sm:$0xf]
  %v78 = vld [vmem:[%s1 + $0xb0] sm:$0xf]
  %v79 = vld [vmem:[%s1 + $0xb4] sm:$0xf]
  %v80 = vld [vmem:[%s1 + $0xb8] sm:$0xf]
  %v81 = vld [vmem:[%s1 + $0xbc] sm:$0xf]
  %v82 = vld [vmem:[%s1 + $0xc0] sm:$0xf]
  %v83 = vld [vmem:[%s1 + $0xc4] sm:$0xf]
  %v84 = vld [vmem:[%s1 + $0xc8] sm:$0xf]
  %v85 = vld [vmem:[%s1 + $0xcc] sm:$0xf]
  %v86 = vld [vmem:[%s1 + $0xd0] sm:$0xf]
  %v87 = vld [vmem:[%s1 + $0xd4] sm:$0xf]
  %v88 = vld [vmem:[%s1 + $0xd8] sm:$0xf]
  %v89 = vld [vmem:[%s1 + $0xdc] sm:$0xf]
  %v90 = vld [vmem:[%s1 + $0xe0] sm:$0xf]
  %v91 = vld [vmem:[%s1 + $0xe4] sm:$0xf]
  %v92 = vld [vmem:[%s1 + $0xe8] sm:$0xf]
  %v93 = vld [vmem:[%s1 + $0xec] sm:$0xf]
  %v94 = vld [vmem:[%s1 + $0xf0] sm:$0xf]
  %v95 = vld [vmem:[%s1 + $0xf4] sm:$0xf]
  %v96 = vld [vmem:[%s1 + $0xf8] sm:$0xf]
  %v97 = vld [vmem:[%s1 + $0xfc] sm:$0xf]
  %v98 = vld [vmem:[%s1 + $0x100] sm:$0xf]
  %v99 = vld [vmem:[%s1 + $0x104] sm:$0xf]
  %v100 = vld [vmem:[%s1 + $0x108] sm:$0xf]
  %v101 = vld [vmem:[%s1 + $0x10c] sm:$0xf]
  %v102 = vld [vmem:[%s1 + $0x110] sm:$0xf]
  %v103 = vld [vmem:[%s1 + $0x114] sm:$0xf]
  %v104 = vld [vmem:[%s1 + $0x118] sm:$0xf]
  %v105 = vld [vmem:[%s1 + $0x11c] sm:$0xf]
  %v106 = vld [vmem:[%s2] sm:$0x1]
  %v108 = vlaneseq
  %v109 = vshrl.u32 %v108, 7
  %v110 = vsub.s32 0, %v109
  %v111 = vrot.slane %v106, %v110
  %v114 = vcombine.high %v33, %v33
  %v116 = vunpack.c.l.s4 1966171168
  %v117 = vunpack.c.0.s8 %v116
  %v118 = vlaneseq
  %v119 = vshrl.u32 %v118, 7
  %v120 = vsub.s32 %v117, %v119
  %v121 = vrot.slane %v33, %v120
  %v123 = vunpack.c.l.s4 1966171168
  %v124 = vunpack.c.0.s8 %v123
  %v125 = vlaneseq
  %v126 = vshrl.u32 %v125, 7
  %v127 = vsub.s32 %v124, %v126
  %v128 = vrot.slane %v114, %v127
  %v129 = vcombine.high %v121, %v121
  %v131 = vunpack.c.l.s4 1966171168
  %v132 = vunpack.c.0.s8 %v131
  %v133 = vlaneseq
  %v134 = vshrl.u32 %v133, 7
  %v135 = vsub.s32 %v132, %v134
  %v136 = vrot.slane %v121, %v135
  %v138 = vunpack.c.l.s4 1966171168
  %v139 = vunpack.c.0.s8 %v138
  %v140 = vlaneseq
  %v141 = vshrl.u32 %v140, 7
  %v142 = vsub.s32 %v139, %v141
  %v143 = vrot.slane %v128, %v142
  %v145 = vunpack.c.l.s4 1966171168
  %v146 = vunpack.c.0.s8 %v145
  %v147 = vlaneseq
  %v148 = vshrl.u32 %v147, 7
  %v149 = vsub.s32 %v146, %v148
  %v150 = vrot.slane %v129, %v149
  %v151 = vcombine.high %v136, %v136
  %v152 = vcombine.high %v150, %v150
  %v229 = vunpack.c.l.b16 %v34
  %v230 = vunpack.c.l.b16 %v35
  %v231 = vunpack.c.l.b16 %v36
  %v232 = vunpack.c.l.b16 %v37
  %v233 = vunpack.c.l.b16 %v38
  %v234 = vunpack.c.l.b16 %v39
  %v235 = vunpack.c.l.b16 %v40
  %v236 = vunpack.c.l.b16 %v41
  %v237 = vunpack.c.l.b16 %v42
  %v238 = vunpack.c.l.b16 %v43
  %v239 = vunpack.c.l.b16 %v44
  %v240 = vunpack.c.l.b16 %v45
  %v241 = vunpack.c.l.b16 %v46
  %v242 = vunpack.c.l.b16 %v47
  %v243 = vunpack.c.l.b16 %v48
  %v244 = vunpack.c.l.b16 %v49
  %v245 = vunpack.c.l.b16 %v50
  %v246 = vunpack.c.l.b16 %v51
  %v247 = vunpack.c.l.b16 %v52
  %v248 = vunpack.c.l.b16 %v53
  %v249 = vunpack.c.l.b16 %v54
  %v250 = vunpack.c.l.b16 %v55
  %v251 = vunpack.c.l.b16 %v56
  %v252 = vunpack.c.l.b16 %v57
  %v253 = vunpack.c.l.b16 %v58
  %v254 = vunpack.c.l.b16 %v59
  %v255 = vunpack.c.l.b16 %v60
  %v256 = vunpack.c.l.b16 %v61
  %v257 = vunpack.c.l.b16 %v62
  %v258 = vunpack.c.l.b16 %v63
  %v259 = vunpack.c.l.b16 %v64
  %v260 = vunpack.c.l.b16 %v65
  %v261 = vunpack.c.l.b16 %v66
  %v262 = vunpack.c.l.b16 %v67
  %v263 = vunpack.c.l.b16 %v68
  %v264 = vunpack.c.l.b16 %v69
  %v265 = vunpack.c.l.b16 %v70
  %v266 = vunpack.c.l.b16 %v71
  %v267 = vunpack.c.l.b16 %v72
  %v268 = vunpack.c.l.b16 %v73
  %v269 = vunpack.c.l.b16 %v74
  %v270 = vunpack.c.l.b16 %v75
  %v271 = vunpack.c.l.b16 %v76
  %v272 = vunpack.c.l.b16 %v77
  %v273 = vunpack.c.l.b16 %v78
  %v274 = vunpack.c.l.b16 %v79
  %v275 = vunpack.c.l.b16 %v80
  %v276 = vunpack.c.l.b16 %v81
  %v277 = vunpack.c.l.b16 %v82
  %v278 = vunpack.c.l.b16 %v83
  %v279 = vunpack.c.l.b16 %v84
  %v280 = vunpack.c.l.b16 %v85
  %v281 = vunpack.c.l.b16 %v86
  %v282 = vunpack.c.l.b16 %v87
  %v283 = vunpack.c.l.b16 %v88
  %v284 = vunpack.c.l.b16 %v89
  %v285 = vunpack.c.l.b16 %v90
  %v286 = vunpack.c.l.b16 %v91
  %v287 = vunpack.c.l.b16 %v92
  %v288 = vunpack.c.l.b16 %v93
  %v289 = vunpack.c.l.b16 %v94
  %v290 = vunpack.c.l.b16 %v95
  %v291 = vunpack.c.l.b16 %v96
  %v292 = vunpack.c.l.b16 %v97
  %v293 = vunpack.c.l.b16 %v98
  %v294 = vunpack.c.l.b16 %v99
  %v295 = vunpack.c.l.b16 %v100
  %v296 = vunpack.c.l.b16 %v101
  %v297 = vunpack.c.l.b16 %v102
  %v298 = vunpack.c.l.b16 %v103
  %v299 = vunpack.c.l.b16 %v104
  %v300 = vunpack.c.l.b16 %v105
  %v301 = vpack.c.b16 %v230, %v229
  %v302 = vpack.c.b16 %v232, %v231
  %v303 = vpack.c.b16 %v234, %v233
  %v304 = vpack.c.b16 %v236, %v235
  %v305 = vpack.c.b16 %v238, %v237
  %v306 = vpack.c.b16 %v240, %v239
  %v307 = vpack.c.b16 %v242, %v241
  %v308 = vpack.c.b16 %v244, %v243
  %v309 = vpack.c.b16 %v246, %v245
  %v310 = vpack.c.b16 %v248, %v247
  %v311 = vpack.c.b16 %v250, %v249
  %v312 = vpack.c.b16 %v252, %v251
  %v313 = vpack.c.b16 %v254, %v253
  %v314 = vpack.c.b16 %v256, %v255
  %v315 = vpack.c.b16 %v258, %v257
  %v316 = vpack.c.b16 %v260, %v259
  %v317 = vpack.c.b16 %v262, %v261
  %v318 = vpack.c.b16 %v264, %v263
  %v319 = vpack.c.b16 %v266, %v265
  %v320 = vpack.c.b16 %v268, %v267
  %v321 = vpack.c.b16 %v270, %v269
  %v322 = vpack.c.b16 %v272, %v271
  %v323 = vpack.c.b16 %v274, %v273
  %v324 = vpack.c.b16 %v276, %v275
  %v325 = vpack.c.b16 %v278, %v277
  %v326 = vpack.c.b16 %v280, %v279
  %v327 = vpack.c.b16 %v282, %v281
  %v328 = vpack.c.b16 %v284, %v283
  %v329 = vpack.c.b16 %v286, %v285
  %v330 = vpack.c.b16 %v288, %v287
  %v331 = vpack.c.b16 %v290, %v289
  %v332 = vpack.c.b16 %v292, %v291
  %v333 = vpack.c.b16 %v294, %v293
  %v334 = vpack.c.b16 %v296, %v295
  %v335 = vpack.c.b16 %v298, %v297
  %v336 = vpack.c.b16 %v300, %v299
  %vm373 = vcmask 523264
  %v375 = vsel %vm373, %v143, 0
  %377 = vmatprep.subr.bf16.mxu0 0
  %378 = vmatpush1.bf16.msra.mxu0 %v301
  %379 = vmatprep.subr.bf16.mxu0 0
  %380 = vmatpush1.bf16.msra.mxu0 %v302
  %381 = vmatprep.subr.bf16.mxu0 0
  %382 = vmatpush1.bf16.msra.mxu0 %v303
  %383 = vmatprep.subr.bf16.mxu0 0
  %384 = vmatpush1.bf16.msra.mxu0 %v304
  %385 = vmatprep.subr.bf16.mxu0 0
  %386 = vmatpush1.bf16.msra.mxu0 %v305
  %387 = vmatprep.subr.bf16.mxu0 0
  %388 = vmatpush1.bf16.msra.mxu0 %v306
  %389 = vmatprep.subr.bf16.mxu0 0
  %390 = vmatpush1.bf16.msra.mxu0 %v307
  %391 = vmatprep.subr.bf16.mxu0 0
  %392 = vmatpush1.bf16.msra.mxu0 %v308
  %393 = vmatprep.subr.bf16.mxu0 0
  %394 = vmatpush1.bf16.msra.mxu0 %v309
  %395 = vmatprep.subr.bf16.mxu0 0
  %396 = vmatpush1.bf16.msra.mxu0 %v310
  %397 = vmatprep.subr.bf16.mxu0 0
  %398 = vmatpush1.bf16.msra.mxu0 %v311
  %399 = vmatprep.subr.bf16.mxu0 0
  %400 = vmatpush1.bf16.msra.mxu0 %v312
  %401 = vmatprep.subr.bf16.mxu0 0
  %402 = vmatpush1.bf16.msra.mxu0 %v313
  %403 = vmatprep.subr.bf16.mxu0 0
  %404 = vmatpush1.bf16.msra.mxu0 %v314
  %405 = vmatprep.subr.bf16.mxu0 0
  %406 = vmatpush1.bf16.msra.mxu0 %v315
  %407 = vmatprep.subr.bf16.mxu0 0
  %408 = vmatpush1.bf16.msra.mxu0 %v316
  %409 = vmatprep.mubr.bf16.mxu0 %v150
  %410 = vmatmul.mubr.bf16.gmra.mrb[0].mxu0 %v136
  %v411 = vpop.f32.mrb[0].mxu0
  %v412 = vadd.f32 %v111, %v411
  %v413 = vpop.f32.mrb[0].mxu0
  %v414 = vpop.f32.mrb[0].mxu0
  %v415 = vpop.f32.mrb[0].mxu0
  %416 = vdwg.mxu0
  %417 = vmatprep.subr.bf16.mxu0 0
  %418 = vmatpush1.bf16.msra.mxu0 %v317
  %419 = vmatprep.subr.bf16.mxu0 0
  %420 = vmatpush1.bf16.msra.mxu0 %v318
  %421 = vmatprep.subr.bf16.mxu0 0
  %422 = vmatpush1.bf16.msra.mxu0 %v319
  %423 = vmatprep.subr.bf16.mxu0 0
  %424 = vmatpush1.bf16.msra.mxu0 %v320
  %425 = vmatprep.subr.bf16.mxu0 0
  %426 = vmatpush1.bf16.msra.mxu0 %v321
  %427 = vmatprep.subr.bf16.mxu0 0
  %428 = vmatpush1.bf16.msra.mxu0 %v322
  %429 = vmatprep.subr.bf16.mxu0 0
  %430 = vmatpush1.bf16.msra.mxu0 %v323
  %431 = vmatprep.subr.bf16.mxu0 0
  %432 = vmatpush1.bf16.msra.mxu0 %v324
  %433 = vmatprep.subr.bf16.mxu0 0
  %434 = vmatpush1.bf16.msra.mxu0 %v325
  %435 = vmatprep.subr.bf16.mxu0 0
  %436 = vmatpush1.bf16.msra.mxu0 %v326
  %437 = vmatprep.subr.bf16.mxu0 0
  %438 = vmatpush1.bf16.msra.mxu0 %v327
  %439 = vmatprep.subr.bf16.mxu0 0
  %440 = vmatpush1.bf16.msra.mxu0 %v328
  %441 = vmatprep.subr.bf16.mxu0 0
  %442 = vmatpush1.bf16.msra.mxu0 %v329
  %443 = vmatprep.subr.bf16.mxu0 0
  %444 = vmatpush1.bf16.msra.mxu0 %v330
  %445 = vmatprep.subr.bf16.mxu0 0
  %446 = vmatpush1.bf16.msra.mxu0 %v331
  %447 = vmatprep.subr.bf16.mxu0 0
  %448 = vmatpush1.bf16.msra.mxu0 %v332
  %449 = vmatprep.mubr.bf16.mxu0 %v152
  %450 = vmatmul.mubr.bf16.gmra.mrb[0].mxu0 %v151
  %v451 = vpop.f32.mrb[0].mxu0
  %v452 = vadd.f32 %v412, %v451
  %v453 = vpop.f32.mrb[0].mxu0
  %v454 = vpop.f32.mrb[0].mxu0
  %v455 = vpop.f32.mrb[0].mxu0
  %456 = vdwg.mxu0
  %457 = vmatprep.subr.bf16.mxu0 0
  %458 = vmatpush1.bf16.msra.mxu0 %v333
  %459 = vmatprep.subr.bf16.mxu0 0
  %460 = vmatpush1.bf16.msra.mxu0 %v334
  %461 = vmatprep.subr.bf16.mxu0 0
  %462 = vmatpush1.bf16.msra.mxu0 %v335
  %463 = vmatprep.subr.bf16.mxu0 0
  %464 = vmatpush1.bf16.msra.mxu0 %v336
  %465 = vmatprep.subr.bf16.mxu0 0
  %466 = vmatpush1.bf16.msra.mxu0 0
  %467 = vmatprep.subr.bf16.mxu0 0
  %468 = vmatpush1.bf16.msra.mxu0 0
  %469 = vmatprep.subr.bf16.mxu0 0
  %470 = vmatpush1.bf16.msra.mxu0 0
  %471 = vmatprep.subr.bf16.mxu0 0
  %472 = vmatpush1.bf16.msra.mxu0 0
  %473 = vmatprep.subr.bf16.mxu0 0
  %474 = vmatpush1.bf16.msra.mxu0 0
  %475 = vmatprep.subr.bf16.mxu0 0
  %476 = vmatpush1.bf16.msra.mxu0 0
  %477 = vmatprep.subr.bf16.mxu0 0
  %478 = vmatpush1.bf16.msra.mxu0 0
  %479 = vmatprep.subr.bf16.mxu0 0
  %480 = vmatpush1.bf16.msra.mxu0 0
  %481 = vmatprep.subr.bf16.mxu0 0
  %482 = vmatpush1.bf16.msra.mxu0 0
  %483 = vmatprep.subr.bf16.mxu0 0
  %484 = vmatpush1.bf16.msra.mxu0 0
  %485 = vmatprep.subr.bf16.mxu0 0
  %486 = vmatpush1.bf16.msra.mxu0 0
  %487 = vmatprep.subr.bf16.mxu0 0
  %488 = vmatpush1.bf16.msra.mxu0 0
  %489 = vmatprep.mubr.bf16.mxu0 0
  %490 = vmatmul.mubr.bf16.gmra.mrb[0].mxu0 %v375
  %v491 = vpop.f32.mrb[0].mxu0
  %v492 = vadd.f32 %v452, %v491
  %v493 = vpop.f32.mrb[0].mxu0
  %v494 = vpop.f32.mrb[0].mxu0
  %v495 = vpop.f32.mrb[0].mxu0
  %496 = vdwg.mxu0
  %v497 = vmax.f32 %v492, 0.0
  %v498 = vpack.c.bf16 %v497, %v497
  %v499 = vld [vmem:[%s3] sm:$0xf]
  %v500 = vld [vmem:[%s3 + $0x4] sm:$0xf]
  %v501 = vld [vmem:[%s3 + $0x8] sm:$0xf]
  %v502 = vld [vmem:[%s3 + $0xc] sm:$0xf]
  %v503 = vld [vmem:[%s3 + $0x10] sm:$0xf]
  %v504 = vld [vmem:[%s3 + $0x14] sm:$0xf]
  %v505 = vld [vmem:[%s3 + $0x18] sm:$0xf]
  %v506 = vld [vmem:[%s3 + $0x1c] sm:$0xf]
  %v507 = vld [vmem:[%s4] sm:$0x1]
  %v509 = vlaneseq
  %v510 = vshrl.u32 %v509, 7
  %v511 = vsub.s32 0, %v510
  %v512 = vrot.slane %v507, %v511
  %v522 = vunpack.c.l.b16 %v499
  %v523 = vunpack.c.l.b16 %v500
  %v524 = vunpack.c.l.b16 %v501
  %v525 = vunpack.c.l.b16 %v502
  %v526 = vunpack.c.l.b16 %v503
  %v527 = vunpack.c.l.b16 %v504
  %v528 = vunpack.c.l.b16 %v505
  %v529 = vunpack.c.l.b16 %v506
  %v530 = vpack.c.b16 %v523, %v522
  %v531 = vpack.c.b16 %v525, %v524
  %v532 = vpack.c.b16 %v527, %v526
  %v533 = vpack.c.b16 %v529, %v528
  %v539 = vsel %vm373, %v498, 0
  %541 = vmatprep.subr.bf16.mxu0 0
  %542 = vmatpush1.bf16.msra.mxu0 %v530
  %543 = vmatprep.subr.bf16.mxu0 0
  %544 = vmatpush1.bf16.msra.mxu0 %v531
  %545 = vmatprep.subr.bf16.mxu0 0
  %546 = vmatpush1.bf16.msra.mxu0 %v532
  %547 = vmatprep.subr.bf16.mxu0 0
  %548 = vmatpush1.bf16.msra.mxu0 %v533
  %549 = vmatprep.subr.bf16.mxu0 0
  %550 = vmatpush1.bf16.msra.mxu0 0
  %551 = vmatprep.subr.bf16.mxu0 0
  %552 = vmatpush1.bf16.msra.mxu0 0
  %553 = vmatprep.subr.bf16.mxu0 0
  %554 = vmatpush1.bf16.msra.mxu0 0
  %555 = vmatprep.subr.bf16.mxu0 0
  %556 = vmatpush1.bf16.msra.mxu0 0
  %557 = vmatprep.subr.bf16.mxu0 0
  %558 = vmatpush1.bf16.msra.mxu0 0
  %559 = vmatprep.subr.bf16.mxu0 0
  %560 = vmatpush1.bf16.msra.mxu0 0
  %561 = vmatprep.subr.bf16.mxu0 0
  %562 = vmatpush1.bf16.msra.mxu0 0
  %563 = vmatprep.subr.bf16.mxu0 0
  %564 = vmatpush1.bf16.msra.mxu0 0
  %565 = vmatprep.subr.bf16.mxu0 0
  %566 = vmatpush1.bf16.msra.mxu0 0
  %567 = vmatprep.subr.bf16.mxu0 0
  %568 = vmatpush1.bf16.msra.mxu0 0
  %569 = vmatprep.subr.bf16.mxu0 0
  %570 = vmatpush1.bf16.msra.mxu0 0
  %571 = vmatprep.subr.bf16.mxu0 0
  %572 = vmatpush1.bf16.msra.mxu0 0
  %573 = vmatprep.mubr.bf16.mxu0 0
  %574 = vmatmul.mubr.bf16.gmra.mrb[0].mxu0 %v539
  %v575 = vpop.f32.mrb[0].mxu0
  %v576 = vadd.f32 %v512, %v575
  %v577 = vpop.f32.mrb[0].mxu0
  %v578 = vpop.f32.mrb[0].mxu0
  %v579 = vpop.f32.mrb[0].mxu0
  %580 = vdwg.mxu0
  %v581 = vmax.f32 %v576, 0.0
  %v582 = vpack.c.bf16 %v581, %v581
  %v583 = vld [vmem:[%s5] sm:$0xf]
  %v584 = vld [vmem:[%s5 + $0x4] sm:$0xf]
  %v585 = vld [vmem:[%s5 + $0x8] sm:$0xf]
  %v586 = vld [vmem:[%s5 + $0xc] sm:$0xf]
  %v587 = vld [vmem:[%s6] sm:$0x1]
  %v589 = vlaneseq
  %v590 = vshrl.u32 %v589, 7
  %v591 = vsub.s32 0, %v590
  %v592 = vrot.slane %v587, %v591
  %v598 = vunpack.c.l.b16 %v583
  %v599 = vunpack.c.l.b16 %v584
  %v600 = vunpack.c.l.b16 %v585
  %v601 = vunpack.c.l.b16 %v586
  %v602 = vpack.c.b16 %v599, %v598
  %v603 = vpack.c.b16 %v601, %v600
  %vm606 = vcmask 261120
  %v608 = vsel %vm606, %v582, 0
  %610 = vmatprep.subr.bf16.mxu0 0
  %611 = vmatpush1.bf16.msra.mxu0 %v602
  %612 = vmatprep.subr.bf16.mxu0 0
  %613 = vmatpush1.bf16.msra.mxu0 %v603
  %614 = vmatprep.subr.bf16.mxu0 0
  %615 = vmatpush1.bf16.msra.mxu0 0
  %616 = vmatprep.subr.bf16.mxu0 0
  %617 = vmatpush1.bf16.msra.mxu0 0
  %618 = vmatprep.subr.bf16.mxu0 0
  %619 = vmatpush1.bf16.msra.mxu0 0
  %620 = vmatprep.subr.bf16.mxu0 0
  %621 = vmatpush1.bf16.msra.mxu0 0
  %622 = vmatprep.subr.bf16.mxu0 0
  %623 = vmatpush1.bf16.msra.mxu0 0
  %624 = vmatprep.subr.bf16.mxu0 0
  %625 = vmatpush1.bf16.msra.mxu0 0
  %626 = vmatprep.subr.bf16.mxu0 0
  %627 = vmatpush1.bf16.msra.mxu0 0
  %628 = vmatprep.subr.bf16.mxu0 0
  %629 = vmatpush1.bf16.msra.mxu0 0
  %630 = vmatprep.subr.bf16.mxu0 0
  %631 = vmatpush1.bf16.msra.mxu0 0
  %632 = vmatprep.subr.bf16.mxu0 0
  %633 = vmatpush1.bf16.msra.mxu0 0
  %634 = vmatprep.subr.bf16.mxu0 0
  %635 = vmatpush1.bf16.msra.mxu0 0
  %636 = vmatprep.subr.bf16.mxu0 0
  %637 = vmatpush1.bf16.msra.mxu0 0
  %638 = vmatprep.subr.bf16.mxu0 0
  %639 = vmatpush1.bf16.msra.mxu0 0
  %640 = vmatprep.subr.bf16.mxu0 0
  %641 = vmatpush1.bf16.msra.mxu0 0
  %642 = vmatprep.mubr.bf16.mxu0 0
  %643 = vmatmul.mubr.bf16.gmra.mrb[0].mxu0 %v608
  %v644 = vpop.f32.mrb[0].mxu0
  %v645 = vadd.f32 %v592, %v644
  %v646 = vpop.f32.mrb[0].mxu0
  %v647 = vpop.f32.mrb[0].mxu0
  %v648 = vpop.f32.mrb[0].mxu0
  %649 = vdwg.mxu0
  %v650 = vmax.f32 %v645, 0.0
  %v651 = vpack.c.bf16 %v650, %v650
  %v652 = vld [vmem:[%s7] sm:$0xf]
  %v653 = vld [vmem:[%s7 + $0x4] sm:$0xf]
  %v654 = vld [vmem:[%s7 + $0x8] sm:$0xf]
  %v655 = vld [vmem:[%s7 + $0xc] sm:$0xf]
  %v656 = vld [vmem:[%s8] sm:$0x1]
  %v658 = vlaneseq
  %v659 = vshrl.u32 %v658, 7
  %v660 = vsub.s32 0, %v659
  %v661 = vrot.slane %v656, %v660
  %v667 = vunpack.c.l.b16 %v652
  %v668 = vunpack.c.l.b16 %v653
  %v669 = vunpack.c.l.b16 %v654
  %v670 = vunpack.c.l.b16 %v655
  %v671 = vpack.c.b16 %v668, %v667
  %v672 = vpack.c.b16 %v670, %v669
  %v676 = vsel %vm606, %v651, 0
  %678 = vmatprep.subr.bf16.mxu0 0
  %679 = vmatpush1.bf16.msra.mxu0 %v671
  %680 = vmatprep.subr.bf16.mxu0 0
  %681 = vmatpush1.bf16.msra.mxu0 %v672
  %682 = vmatprep.subr.bf16.mxu0 0
  %683 = vmatpush1.bf16.msra.mxu0 0
  %684 = vmatprep.subr.bf16.mxu0 0
  %685 = vmatpush1.bf16.msra.mxu0 0
  %686 = vmatprep.subr.bf16.mxu0 0
  %687 = vmatpush1.bf16.msra.mxu0 0
  %688 = vmatprep.subr.bf16.mxu0 0
  %689 = vmatpush1.bf16.msra.mxu0 0
  %690 = vmatprep.subr.bf16.mxu0 0
  %691 = vmatpush1.bf16.msra.mxu0 0
  %692 = vmatprep.subr.bf16.mxu0 0
  %693 = vmatpush1.bf16.msra.mxu0 0
  %694 = vmatprep.subr.bf16.mxu0 0
  %695 = vmatpush1.bf16.msra.mxu0 0
  %696 = vmatprep.subr.bf16.mxu0 0
  %697 = vmatpush1.bf16.msra.mxu0 0
  %698 = vmatprep.subr.bf16.mxu0 0
  %699 = vmatpush1.bf16.msra.mxu0 0
  %700 = vmatprep.subr.bf16.mxu0 0
  %701 = vmatpush1.bf16.msra.mxu0 0
  %702 = vmatprep.subr.bf16.mxu0 0
  %703 = vmatpush1.bf16.msra.mxu0 0
  %704 = vmatprep.subr.bf16.mxu0 0
  %705 = vmatpush1.bf16.msra.mxu0 0
  %706 = vmatprep.subr.bf16.mxu0 0
  %707 = vmatpush1.bf16.msra.mxu0 0
  %708 = vmatprep.subr.bf16.mxu0 0
  %709 = vmatpush1.bf16.msra.mxu0 0
  %710 = vmatprep.mubr.bf16.mxu0 0
  %711 = vmatmul.mubr.bf16.gmra.mrb[0].mxu0 %v676
  %v712 = vpop.f32.mrb[0].mxu0
  %v713 = vadd.f32 %v661, %v712
  %v714 = vpop.f32.mrb[0].mxu0
  %v715 = vpop.f32.mrb[0].mxu0
  %v716 = vpop.f32.mrb[0].mxu0
  %717 = vdwg.mxu0
  %v718 = vlaneseq
  %v719 = vand.u32 %v718, 127
  %vm720 = vcmp.ge.s32.totalorder %v719, 6
  %vm721 = vcmp.lt.s32.totalorder %v719, 12
  %vm722 = vmand %vm720, %vm721
  %v723 = vmax.f32 %v713, -20.0
  %v724 = vmin.f32 %v723, 2.0
  %v725 = vsel %vm722, %v724, %v713
  %726 = vst [vmem:[%s9] sm:$0x3] %v725
  // Predicated region
  $region38: #{conv_gaussian_policy_forward.5} parent=0 // pred_check
    _
  $region39: #{conv_gaussian_policy_forward.5} parent=0 // pred_check_branch
    %728 = sbr.rel (0) target = $region41
  $region40: #{conv_gaussian_policy_forward.5} parent=0 // pred_region
    _
  $region41: #{conv_gaussian_policy_forward.5} parent=0 // pred_fallthru
    _
  // Predicated region
  $region42: #{conv_gaussian_policy_forward.5} parent=0 // pred_check
    _
  $region43: #{conv_gaussian_policy_forward.5} parent=0 // pred_check_branch
    %730 = sbr.rel (0) target = $region45
  $region44: #{conv_gaussian_policy_forward.5} parent=0 // pred_region
    _
  $region45: #{conv_gaussian_policy_forward.5} parent=0 // pred_fallthru
    _

</llo_original>
